<compile_context>
chip_gen: v5e
topology: v5e:2x2
jax: 0.10.0
libtpu: 0.0.40
codegen_flags: <defaults>
</compile_context>

<pallas_src>
import math

import jax
import jax.numpy as jnp
from jax.experimental import pallas as pl
from jax.experimental.pallas import tpu as pltpu


# ---------------------------- fused kernel ----------------------------

def _make_fused_kernel(gamma):
    def kernel(x_ref, adj_ref, onehot_ref, gumb_ref,
               ocl_ref, cl_ref, cc_ref,
               selx_ref, sely_ref, seg_ref,
               wenc_ref, benc_ref, wrat_ref, brat_ref,
               gw1_ref, gb1_ref, gs_ref, gt_ref, gw2_ref, gb2_ref,
               pw1_ref, pb1_ref, ps_ref, pt_ref, pw2_ref, pb2_ref,
               ewa_ref, ewb_ref, eb_ref,
               awx_ref, awy_ref, ab1_ref, aw2_ref, ab2_ref,
               bwx_ref, bwy_ref, bb1_ref, bw2_ref, bb2_ref,
               preds_ref, scal_ref):
        f32 = jnp.float32
        x0 = x_ref[...]
        adj = adj_ref[...]                 # loaded once, reused by both GNN stacks

        # ---- GIN-style stand-in GNN stacks (stacked weights, adj resident) ----
        def gin_stack(w_ref, b_ref, h):
            for l in range(w_ref.shape[0]):      # tiny static trip count
                agg = jnp.dot(adj, h, preferred_element_type=f32)
                lin = jnp.dot(agg, w_ref[l], preferred_element_type=f32) + b_ref[l]
                h = jnp.maximum(lin, 0.0) + h    # residual
            return h

        h_node = gin_stack(wenc_ref, benc_ref, x0)     # graph_encoder
        x_rat = gin_stack(wrat_ref, brat_ref, x0)      # rationale_gnn_node

        # ---- mean-pool weights (shared by h_out and separator pooling) ----
        onehot = onehot_ref[...]                               # (G, N)
        counts = jnp.sum(onehot, axis=1, keepdims=True)        # (G, 1)
        pool_w = onehot / jnp.maximum(counts, 1.0)             # 0-node-graph safe
        n_graphs = onehot.shape[0]

        h_out = jnp.dot(pool_w, h_node, preferred_element_type=f32)   # (G, emb)

        # ---- cluster-center lookup (tiny in-VMEM dots, no extra launches) ----
        centers = cc_ref[...]
        env = jnp.dot(cl_ref[...], centers, preferred_element_type=f32)
        ori_env = jnp.dot(ocl_ref[...], centers, preferred_element_type=f32)

        # ---- env_mlp without materializing concat: [a,b]@W = a@Wa + b@Wb ----
        ewa = ewa_ref[...]
        ewb = ewb_ref[...]
        ebias = eb_ref[...]
        augument_g = (jnp.dot(h_out, ewa, preferred_element_type=f32)
                      + jnp.dot(env, ewb, preferred_element_type=f32) + ebias)
        cycle_g = (jnp.dot(augument_g, ewa, preferred_element_type=f32)
                   + jnp.dot(ori_env, ewb, preferred_element_type=f32) + ebias)

        def mlp2(h, w1, b1, s, t, w2, b2):
            # Linear -> BatchNorm1d(eval, folded) -> ReLU -> Dropout(eval=id) -> Linear
            h = jnp.dot(h, w1, preferred_element_type=f32) + b1
            h = h * s + t
            h = jnp.maximum(h, 0.0)
            return jnp.dot(h, w2, preferred_element_type=f32) + b2

        # ---- separator: gate_nn -> gumbel-softmax (tau=1, soft) -> pooling ----
        gate_logits = mlp2(x_rat, gw1_ref[...], gb1_ref[...], gs_ref[...],
                           gt_ref[...], gw2_ref[...], gb2_ref[...])     # (N, 2)
        z = gate_logits + gumb_ref[...]
        z = z - jnp.max(z, axis=-1, keepdims=True)
        e = jnp.exp(z)
        gate = (e / jnp.sum(e, axis=-1, keepdims=True))[:, 1:2]         # (N, 1)

        h_r = jnp.dot(pool_w, gate * h_node, preferred_element_type=f32)   # (G, emb)
        raw_r = jnp.dot(onehot, gate, preferred_element_type=f32)          # (G, 1)
        r_num = raw_r + 1e-8
        env_num = (counts - raw_r) + 1e-8       # sum(1 - gate) == count - sum(gate)
        ratio = r_num / (r_num + env_num)
        loss_reg = jnp.sum(jnp.abs(ratio - gamma), axis=0, keepdims=True) / n_graphs

        # ---- predictor, batched over [h_out; augument_g; h_r] ----
        # Row-stack via tiny iota selection matmuls: keeps lowering to plain
        # iota/compare/dot (no unaligned sublane concat); 3 (3G,G)x(G,emb)
        # MXU pushes are noise.  The final Linear weights were zero-padded to a
        # 128-lane width in the wrapper so this store is a full, unmasked vst.
        rr = jax.lax.broadcasted_iota(jnp.int32, (3 * n_graphs, n_graphs), 0)
        cc = jax.lax.broadcasted_iota(jnp.int32, (3 * n_graphs, n_graphs), 1)
        s1 = (rr == cc).astype(f32)
        s2 = (rr == cc + n_graphs).astype(f32)
        s3 = (rr == cc + 2 * n_graphs).astype(f32)
        h_stack = (jnp.dot(s1, h_out, preferred_element_type=f32)
                   + jnp.dot(s2, augument_g, preferred_element_type=f32)
                   + jnp.dot(s3, h_r, preferred_element_type=f32))        # (3G, emb)
        preds_ref[...] = mlp2(h_stack, pw1_ref[...], pb1_ref[...], ps_ref[...],
                              pt_ref[...], pw2_ref[...], pb2_ref[...])    # (3G, 128pad)

        # ---- InfoNCE (all-pairs fully vectorized, no python loop over rows) ----
        def softplus(v):   # torch.nn.Softplus(beta=1, threshold=20)
            return jnp.where(v > 20.0, v, jnp.log1p(jnp.exp(jnp.minimum(v, 20.0))))

        sel_x = selx_ref[...]      # (n^2, n): row r=i*n+j picks x[j]
        sel_y = sely_ref[...]      # (n^2, n): row r=i*n+j picks y[i]
        segm = seg_ref[...]        # (n, n^2): groups rows by i

        def infonce(xs, ys, wx, wy, b1, w2, b2):
            n = xs.shape[0]
            xa = jnp.dot(xs, wx, preferred_element_type=f32)      # (n, hid)
            ya = jnp.dot(ys, wy, preferred_element_type=f32)      # (n, hid)
            # matched pairs T0[k] = F(x[k], y[k])
            h0 = jnp.maximum(xa + ya + b1, 0.0)
            t0 = softplus(jnp.dot(h0, w2, preferred_element_type=f32) + b2)   # (n,1)
            # all pairs T1[i,j] = F(x[j], y[i]) in one batched matmul
            x_rep = jnp.dot(sel_x, xa, preferred_element_type=f32)            # (n^2,hid)
            y_rep = jnp.dot(sel_y, ya, preferred_element_type=f32)
            hall = jnp.maximum(x_rep + y_rep + b1, 0.0)
            t1 = softplus(jnp.dot(hall, w2, preferred_element_type=f32) + b2)  # (n^2,1)
            # logsumexp over j per group i (global-max stabilized; softplus>=0,
            # floor guards the log against underflow in pathological spreads)
            m = jnp.max(t1, axis=0, keepdims=True)                             # (1,1)
            row_sum = jnp.dot(segm, jnp.exp(t1 - m),
                              preferred_element_type=f32)                      # (n,1)
            lse = jnp.log(jnp.maximum(row_sum, 1e-30)) + m
            t0_mean = jnp.sum(t0, axis=0, keepdims=True) / n                   # (1,1)
            lse_mean = jnp.sum(lse, axis=0, keepdims=True) / n
            lower = t0_mean - (lse_mean - math.log(n))
            return -lower                                                      # (1,1)

        cycle_loss = infonce(h_out, cycle_g, awx_ref[...], awy_ref[...],
                             ab1_ref[...], aw2_ref[...], ab2_ref[...])
        teacher_loss = infonce(h_out, h_r, bwx_ref[...], bwy_ref[...],
                               bb1_ref[...], bw2_ref[...], bb2_ref[...])

        # ---- pack the 3 scalar losses into one lane-dense (1, 128) slab ----
        lane = jax.lax.broadcasted_iota(jnp.int32, (1, 128), 1)
        scal_ref[...] = (jnp.where(lane == 0, loss_reg, 0.0)
                         + jnp.where(lane == 1, cycle_loss, 0.0)
                         + jnp.where(lane == 2, teacher_loss, 0.0))

    return kernel


# ---------------------------- parameters ----------------------------

def init_params(key, emb, num_tasks, num_layer):
    ks = iter(jax.random.split(key, 64))

    def nrm(shape, scale=0.1):
        return (scale * jax.random.normal(next(ks), shape)).astype(jnp.float32)

    def fold_bn(dim, eps=1e-5):
        gamma = jnp.ones((1, dim), jnp.float32)
        beta = jnp.zeros((1, dim), jnp.float32)
        rmean = jnp.zeros((1, dim), jnp.float32)
        rvar = jnp.ones((1, dim), jnp.float32)
        scale = gamma / jnp.sqrt(rvar + eps)
        shift = beta - rmean * scale
        return scale, shift

    params = {}
    # stacked GNN layer weights: (L, emb, emb), (L, 1, emb)
    params['graph_encoder'] = (nrm((num_layer, emb, emb)), nrm((num_layer, 1, emb)))
    params['rationale_gnn'] = (nrm((2, emb, emb)), nrm((2, 1, emb)))
    s, t = fold_bn(2 * emb)
    params['gate_nn'] = (nrm((emb, 2 * emb)), nrm((1, 2 * emb)), s, t,
                         nrm((2 * emb, 2)), nrm((1, 2)))
    s, t = fold_bn(2 * emb)
    params['predictor'] = (nrm((emb, 2 * emb)), nrm((1, 2 * emb)), s, t,
                           nrm((2 * emb, num_tasks)), nrm((1, num_tasks)))
    # env_mlp Linear(2*emb, emb) split into two (emb, emb) halves (no concat needed)
    params['env_mlp'] = (nrm((emb, emb)), nrm((emb, emb)), nrm((1, emb)))

    def infonce_params():
        hid = (emb // 2) * 2           # F_func: Linear(2*emb, emb) -> ReLU -> Linear(emb, 1)
        return (nrm((emb, hid)),       # W1 rows acting on x
                nrm((emb, hid)),       # W1 rows acting on y
                nrm((1, hid)),
                nrm((hid, 1)),
                nrm((1, 1)))

    params['infonce'] = infonce_params()
    params['infonce2'] = infonce_params()
    return params


# ---------------------------- forward (cluster branch) ----------------------------

def graph_c2r_forward(params, x, adj_hat, batch_onehot,
                      ori_cluster_one_hot, cluster_one_hot, cluster_centers,
                      gumbel_noise, gamma=0.4):
    g = batch_onehot.shape[0]
    num_tasks = params['predictor'][4].shape[1]

    # Constant all-pairs selection matrices for InfoNCE (built once outside the
    # kernel; avoids in-kernel integer div/mod). Row r = i*g + j.
    r = jnp.arange(g * g)
    cols = jnp.arange(g)
    sel_x = (r[:, None] % g == cols[None, :]).astype(jnp.float32)    # (g^2, g)
    sel_y = (r[:, None] // g == cols[None, :]).astype(jnp.float32)   # (g^2, g)
    seg = jnp.transpose(sel_y)                                       # (g, g^2)

    # Zero-pad the predictor's final Linear to a lane-dense width so the
    # stacked prediction output is a full (unmasked) 128-lane store.
    nt_pad = max(128, ((num_tasks + 127) // 128) * 128)
    pw1, pb1, ps, pt, pw2, pb2 = params['predictor']
    pw2_p = jnp.zeros((pw2.shape[0], nt_pad), jnp.float32).at[:, :num_tasks].set(pw2)
    pb2_p = jnp.zeros((1, nt_pad), jnp.float32).at[:, :num_tasks].set(pb2)

    inputs = (x, adj_hat, batch_onehot, gumbel_noise,
              ori_cluster_one_hot, cluster_one_hot, cluster_centers,
              sel_x, sel_y, seg,
              *params['graph_encoder'], *params['rationale_gnn'],
              *params['gate_nn'],
              pw1, pb1, ps, pt, pw2_p, pb2_p,
              *params['env_mlp'],
              *params['infonce'], *params['infonce2'])

    out_shape = (jax.ShapeDtypeStruct((3 * g, nt_pad), jnp.float32),  # stacked preds (padded lanes)
                 jax.ShapeDtypeStruct((1, 128), jnp.float32))         # packed losses

    preds, scal = pl.pallas_call(
        _make_fused_kernel(gamma),
        out_shape=out_shape,
        in_specs=[pl.BlockSpec(memory_space=pltpu.MemorySpace.VMEM) for _ in inputs],
        out_specs=(pl.BlockSpec(memory_space=pltpu.MemorySpace.VMEM),
                   pl.BlockSpec(memory_space=pltpu.MemorySpace.VMEM)),
    )(*inputs)

    preds = preds[:, :num_tasks]
    pred_gnn = preds[:g]
    pred_augument_gnn = preds[g:2 * g]
    pred_rem = preds[2 * g:3 * g]
    return {'pred_gnn': pred_gnn,
            'pred_rem': pred_rem,
            'loss_reg': scal[0, 0],
            'pred_augument_gnn': pred_augument_gnn,
            'cycle_loss': scal[0, 1],
            'teacher_loss': scal[0, 2]}


# ---------------------------- demo ----------------------------

if __name__ == "__main__":
    emb = 32
    num_tasks = 2
    num_layer = 3
    n_graphs = 4
    nodes_per_graph = 8
    n_nodes = n_graphs * nodes_per_graph
    n_clusters = 4

    key = jax.random.PRNGKey(0)
    kp, kx, ka, kc1, kc2, kcc, kg = jax.random.split(key, 7)

    params = init_params(kp, emb, num_tasks, num_layer)

    x = jax.random.normal(kx, (n_nodes, emb), jnp.float32)
    a = (jax.random.uniform(ka, (n_nodes, n_nodes)) < 0.2).astype(jnp.float32)
    adj_hat = jnp.minimum(a + a.T, 1.0) + jnp.eye(n_nodes, dtype=jnp.float32)

    batch = jnp.repeat(jnp.arange(n_graphs), nodes_per_graph)        # node -> graph id
    batch_onehot = (batch[None, :] == jnp.arange(n_graphs)[:, None]).astype(jnp.float32)

    cluster_one_hot = jax.nn.one_hot(
        jax.random.randint(kc1, (n_graphs,), 0, n_clusters), n_clusters, dtype=jnp.float32)
    ori_cluster_one_hot = jax.nn.one_hot(
        jax.random.randint(kc2, (n_graphs,), 0, n_clusters), n_clusters, dtype=jnp.float32)
    cluster_centers = jax.random.normal(kcc, (n_clusters, emb), jnp.float32)

    u = jax.random.uniform(kg, (n_nodes, 2), minval=1e-6, maxval=1.0 - 1e-6)
    gumbel_noise = -jnp.log(-jnp.log(u))

    fwd = jax.jit(graph_c2r_forward)   # gamma left at default 0.4 (compile-time const)
    out = fwd(params, x, adj_hat, batch_onehot,
              ori_cluster_one_hot, cluster_one_hot, cluster_centers, gumbel_noise)
    out = jax.tree_util.tree_map(jax.block_until_ready, out)
    assert all(bool(jnp.all(jnp.isfinite(v)))
               for v in jax.tree_util.tree_leaves(out))
    print("KERNEL_OK")
</pallas_src>

<mosaic_0001>
module attributes {stable_mosaic.version = 11 : i64} {
  func.func @kernel(%arg0: memref<32x32xf32, #tpu.memory_space<vmem>>, %arg1: memref<32x32xf32, #tpu.memory_space<vmem>>, %arg2: memref<4x32xf32, #tpu.memory_space<vmem>>, %arg3: memref<32x2xf32, #tpu.memory_space<vmem>>, %arg4: memref<4x4xf32, #tpu.memory_space<vmem>>, %arg5: memref<4x4xf32, #tpu.memory_space<vmem>>, %arg6: memref<4x32xf32, #tpu.memory_space<vmem>>, %arg7: memref<16x4xf32, #tpu.memory_space<vmem>>, %arg8: memref<16x4xf32, #tpu.memory_space<vmem>>, %arg9: memref<4x16xf32, #tpu.memory_space<vmem>>, %arg10: memref<3x32x32xf32, #tpu.memory_space<vmem>>, %arg11: memref<3x1x32xf32, #tpu.memory_space<vmem>>, %arg12: memref<2x32x32xf32, #tpu.memory_space<vmem>>, %arg13: memref<2x1x32xf32, #tpu.memory_space<vmem>>, %arg14: memref<32x64xf32, #tpu.memory_space<vmem>>, %arg15: memref<1x64xf32, #tpu.memory_space<vmem>>, %arg16: memref<1x64xf32, #tpu.memory_space<vmem>>, %arg17: memref<1x64xf32, #tpu.memory_space<vmem>>, %arg18: memref<64x2xf32, #tpu.memory_space<vmem>>, %arg19: memref<1x2xf32, #tpu.memory_space<vmem>>, %arg20: memref<32x64xf32, #tpu.memory_space<vmem>>, %arg21: memref<1x64xf32, #tpu.memory_space<vmem>>, %arg22: memref<1x64xf32, #tpu.memory_space<vmem>>, %arg23: memref<1x64xf32, #tpu.memory_space<vmem>>, %arg24: memref<64x128xf32, #tpu.memory_space<vmem>>, %arg25: memref<1x128xf32, #tpu.memory_space<vmem>>, %arg26: memref<32x32xf32, #tpu.memory_space<vmem>>, %arg27: memref<32x32xf32, #tpu.memory_space<vmem>>, %arg28: memref<1x32xf32, #tpu.memory_space<vmem>>, %arg29: memref<32x32xf32, #tpu.memory_space<vmem>>, %arg30: memref<32x32xf32, #tpu.memory_space<vmem>>, %arg31: memref<1x32xf32, #tpu.memory_space<vmem>>, %arg32: memref<32x1xf32, #tpu.memory_space<vmem>>, %arg33: memref<1x1xf32, #tpu.memory_space<vmem>>, %arg34: memref<32x32xf32, #tpu.memory_space<vmem>>, %arg35: memref<32x32xf32, #tpu.memory_space<vmem>>, %arg36: memref<1x32xf32, #tpu.memory_space<vmem>>, %arg37: memref<32x1xf32, #tpu.memory_space<vmem>>, %arg38: memref<1x1xf32, #tpu.memory_space<vmem>>, %arg39: memref<12x128xf32, #tpu.memory_space<vmem>>, %arg40: memref<1x128xf32, #tpu.memory_space<vmem>>) attributes {dimension_semantics = [], scalar_prefetch = 0 : i64, scratch_operands = 0 : i64, tpu.core_type = #tpu.core_type<tc>} {
    %c0 = arith.constant 0 : index
    %c0_0 = arith.constant 0 : index
    %0 = vector.load %arg0[%c0, %c0_0] : memref<32x32xf32, #tpu.memory_space<vmem>>, vector<32x32xf32>
    %c0_1 = arith.constant 0 : index
    %c0_2 = arith.constant 0 : index
    %1 = vector.load %arg1[%c0_1, %c0_2] : memref<32x32xf32, #tpu.memory_space<vmem>>, vector<32x32xf32>
    %cst = arith.constant dense<0.000000e+00> : vector<32x32xf32>
    %2 = tpu.matmul %1, %0, %cst {dimension_numbers = #tpu.dot_dimension_numbers<[1], [0], [0], [1], [0, 0, 1, 1], [], []>} : vector<32x32xf32>, vector<32x32xf32>, vector<32x32xf32> -> vector<32x32xf32>
    %c0_3 = arith.constant 0 : index
    %c0_4 = arith.constant 0 : index
    %c0_5 = arith.constant 0 : index
    %3 = vector.load %arg10[%c0_3, %c0_4, %c0_5] : memref<3x32x32xf32, #tpu.memory_space<vmem>>, vector<1x32x32xf32>
    %4 = vector.shape_cast %3 : vector<1x32x32xf32> to vector<32x32xf32>
    %cst_6 = arith.constant dense<0.000000e+00> : vector<32x32xf32>
    %5 = tpu.matmul %2, %4, %cst_6 {dimension_numbers = #tpu.dot_dimension_numbers<[1], [0], [0], [1], [0, 0, 1, 1], [], []>} : vector<32x32xf32>, vector<32x32xf32>, vector<32x32xf32> -> vector<32x32xf32>
    %c0_7 = arith.constant 0 : index
    %c0_8 = arith.constant 0 : index
    %c0_9 = arith.constant 0 : index
    %6 = vector.load %arg11[%c0_7, %c0_8, %c0_9] : memref<3x1x32xf32, #tpu.memory_space<vmem>>, vector<1x1x32xf32>
    %7 = vector.shape_cast %6 : vector<1x1x32xf32> to vector<1x32xf32>
    %8 = vector.broadcast %7 : vector<1x32xf32> to vector<32x32xf32>
    %9 = arith.addf %5, %8 : vector<32x32xf32>
    %cst_10 = arith.constant 0.000000e+00 : f32
    %10 = vector.broadcast %cst_10 : f32 to vector<32x32xf32>
    %11 = arith.maximumf %9, %10 : vector<32x32xf32>
    %12 = arith.addf %11, %0 : vector<32x32xf32>
    %cst_11 = arith.constant dense<0.000000e+00> : vector<32x32xf32>
    %13 = tpu.matmul %1, %12, %cst_11 {dimension_numbers = #tpu.dot_dimension_numbers<[1], [0], [0], [1], [0, 0, 1, 1], [], []>} : vector<32x32xf32>, vector<32x32xf32>, vector<32x32xf32> -> vector<32x32xf32>
    %c1 = arith.constant 1 : index
    %c0_12 = arith.constant 0 : index
    %c0_13 = arith.constant 0 : index
    %14 = vector.load %arg10[%c1, %c0_12, %c0_13] : memref<3x32x32xf32, #tpu.memory_space<vmem>>, vector<1x32x32xf32>
    %15 = vector.shape_cast %14 : vector<1x32x32xf32> to vector<32x32xf32>
    %cst_14 = arith.constant dense<0.000000e+00> : vector<32x32xf32>
    %16 = tpu.matmul %13, %15, %cst_14 {dimension_numbers = #tpu.dot_dimension_numbers<[1], [0], [0], [1], [0, 0, 1, 1], [], []>} : vector<32x32xf32>, vector<32x32xf32>, vector<32x32xf32> -> vector<32x32xf32>
    %c1_15 = arith.constant 1 : index
    %c0_16 = arith.constant 0 : index
    %c0_17 = arith.constant 0 : index
    %17 = vector.load %arg11[%c1_15, %c0_16, %c0_17] : memref<3x1x32xf32, #tpu.memory_space<vmem>>, vector<1x1x32xf32>
    %18 = vector.shape_cast %17 : vector<1x1x32xf32> to vector<1x32xf32>
    %19 = vector.broadcast %18 : vector<1x32xf32> to vector<32x32xf32>
    %20 = arith.addf %16, %19 : vector<32x32xf32>
    %cst_18 = arith.constant 0.000000e+00 : f32
    %21 = vector.broadcast %cst_18 : f32 to vector<32x32xf32>
    %22 = arith.maximumf %20, %21 : vector<32x32xf32>
    %23 = arith.addf %22, %12 : vector<32x32xf32>
    %cst_19 = arith.constant dense<0.000000e+00> : vector<32x32xf32>
    %24 = tpu.matmul %1, %23, %cst_19 {dimension_numbers = #tpu.dot_dimension_numbers<[1], [0], [0], [1], [0, 0, 1, 1], [], []>} : vector<32x32xf32>, vector<32x32xf32>, vector<32x32xf32> -> vector<32x32xf32>
    %c2 = arith.constant 2 : index
    %c0_20 = arith.constant 0 : index
    %c0_21 = arith.constant 0 : index
    %25 = vector.load %arg10[%c2, %c0_20, %c0_21] : memref<3x32x32xf32, #tpu.memory_space<vmem>>, vector<1x32x32xf32>
    %26 = vector.shape_cast %25 : vector<1x32x32xf32> to vector<32x32xf32>
    %cst_22 = arith.constant dense<0.000000e+00> : vector<32x32xf32>
    %27 = tpu.matmul %24, %26, %cst_22 {dimension_numbers = #tpu.dot_dimension_numbers<[1], [0], [0], [1], [0, 0, 1, 1], [], []>} : vector<32x32xf32>, vector<32x32xf32>, vector<32x32xf32> -> vector<32x32xf32>
    %c2_23 = arith.constant 2 : index
    %c0_24 = arith.constant 0 : index
    %c0_25 = arith.constant 0 : index
    %28 = vector.load %arg11[%c2_23, %c0_24, %c0_25] : memref<3x1x32xf32, #tpu.memory_space<vmem>>, vector<1x1x32xf32>
    %29 = vector.shape_cast %28 : vector<1x1x32xf32> to vector<1x32xf32>
    %30 = vector.broadcast %29 : vector<1x32xf32> to vector<32x32xf32>
    %31 = arith.addf %27, %30 : vector<32x32xf32>
    %cst_26 = arith.constant 0.000000e+00 : f32
    %32 = vector.broadcast %cst_26 : f32 to vector<32x32xf32>
    %33 = arith.maximumf %31, %32 : vector<32x32xf32>
    %34 = arith.addf %33, %23 : vector<32x32xf32>
    %cst_27 = arith.constant dense<0.000000e+00> : vector<32x32xf32>
    %35 = tpu.matmul %1, %0, %cst_27 {dimension_numbers = #tpu.dot_dimension_numbers<[1], [0], [0], [1], [0, 0, 1, 1], [], []>} : vector<32x32xf32>, vector<32x32xf32>, vector<32x32xf32> -> vector<32x32xf32>
    %c0_28 = arith.constant 0 : index
    %c0_29 = arith.constant 0 : index
    %c0_30 = arith.constant 0 : index
    %36 = vector.load %arg12[%c0_28, %c0_29, %c0_30] : memref<2x32x32xf32, #tpu.memory_space<vmem>>, vector<1x32x32xf32>
    %37 = vector.shape_cast %36 : vector<1x32x32xf32> to vector<32x32xf32>
    %cst_31 = arith.constant dense<0.000000e+00> : vector<32x32xf32>
    %38 = tpu.matmul %35, %37, %cst_31 {dimension_numbers = #tpu.dot_dimension_numbers<[1], [0], [0], [1], [0, 0, 1, 1], [], []>} : vector<32x32xf32>, vector<32x32xf32>, vector<32x32xf32> -> vector<32x32xf32>
    %c0_32 = arith.constant 0 : index
    %c0_33 = arith.constant 0 : index
    %c0_34 = arith.constant 0 : index
    %39 = vector.load %arg13[%c0_32, %c0_33, %c0_34] : memref<2x1x32xf32, #tpu.memory_space<vmem>>, vector<1x1x32xf32>
    %40 = vector.shape_cast %39 : vector<1x1x32xf32> to vector<1x32xf32>
    %41 = vector.broadcast %40 : vector<1x32xf32> to vector<32x32xf32>
    %42 = arith.addf %38, %41 : vector<32x32xf32>
    %cst_35 = arith.constant 0.000000e+00 : f32
    %43 = vector.broadcast %cst_35 : f32 to vector<32x32xf32>
    %44 = arith.maximumf %42, %43 : vector<32x32xf32>
    %45 = arith.addf %44, %0 : vector<32x32xf32>
    %cst_36 = arith.constant dense<0.000000e+00> : vector<32x32xf32>
    %46 = tpu.matmul %1, %45, %cst_36 {dimension_numbers = #tpu.dot_dimension_numbers<[1], [0], [0], [1], [0, 0, 1, 1], [], []>} : vector<32x32xf32>, vector<32x32xf32>, vector<32x32xf32> -> vector<32x32xf32>
    %c1_37 = arith.constant 1 : index
    %c0_38 = arith.constant 0 : index
    %c0_39 = arith.constant 0 : index
    %47 = vector.load %arg12[%c1_37, %c0_38, %c0_39] : memref<2x32x32xf32, #tpu.memory_space<vmem>>, vector<1x32x32xf32>
    %48 = vector.shape_cast %47 : vector<1x32x32xf32> to vector<32x32xf32>
    %cst_40 = arith.constant dense<0.000000e+00> : vector<32x32xf32>
    %49 = tpu.matmul %46, %48, %cst_40 {dimension_numbers = #tpu.dot_dimension_numbers<[1], [0], [0], [1], [0, 0, 1, 1], [], []>} : vector<32x32xf32>, vector<32x32xf32>, vector<32x32xf32> -> vector<32x32xf32>
    %c1_41 = arith.constant 1 : index
    %c0_42 = arith.constant 0 : index
    %c0_43 = arith.constant 0 : index
    %50 = vector.load %arg13[%c1_41, %c0_42, %c0_43] : memref<2x1x32xf32, #tpu.memory_space<vmem>>, vector<1x1x32xf32>
    %51 = vector.shape_cast %50 : vector<1x1x32xf32> to vector<1x32xf32>
    %52 = vector.broadcast %51 : vector<1x32xf32> to vector<32x32xf32>
    %53 = arith.addf %49, %52 : vector<32x32xf32>
    %cst_44 = arith.constant 0.000000e+00 : f32
    %54 = vector.broadcast %cst_44 : f32 to vector<32x32xf32>
    %55 = arith.maximumf %53, %54 : vector<32x32xf32>
    %56 = arith.addf %55, %45 : vector<32x32xf32>
    %c0_45 = arith.constant 0 : index
    %c0_46 = arith.constant 0 : index
    %57 = vector.load %arg2[%c0_45, %c0_46] : memref<4x32xf32, #tpu.memory_space<vmem>>, vector<4x32xf32>
    %cst_47 = arith.constant dense<0.000000e+00> : vector<4xf32>
    %58 = vector.multi_reduction <add>, %57, %cst_47 [1] : vector<4x32xf32> to vector<4xf32>
    %59 = vector.shape_cast %58 : vector<4xf32> to vector<4x1xf32>
    %cst_48 = arith.constant 1.000000e+00 : f32
    %60 = vector.broadcast %cst_48 : f32 to vector<4x1xf32>
    %61 = arith.maximumf %59, %60 : vector<4x1xf32>
    %62 = vector.broadcast %61 : vector<4x1xf32> to vector<4x32xf32>
    %63 = arith.divf %57, %62 : vector<4x32xf32>
    %cst_49 = arith.constant dense<0.000000e+00> : vector<4x32xf32>
    %64 = tpu.matmul %63, %34, %cst_49 {dimension_numbers = #tpu.dot_dimension_numbers<[1], [0], [0], [1], [0, 0, 1, 1], [], []>} : vector<4x32xf32>, vector<32x32xf32>, vector<4x32xf32> -> vector<4x32xf32>
    %c0_50 = arith.constant 0 : index
    %c0_51 = arith.constant 0 : index
    %65 = vector.load %arg6[%c0_50, %c0_51] : memref<4x32xf32, #tpu.memory_space<vmem>>, vector<4x32xf32>
    %c0_52 = arith.constant 0 : index
    %c0_53 = arith.constant 0 : index
    %66 = vector.load %arg5[%c0_52, %c0_53] : memref<4x4xf32, #tpu.memory_space<vmem>>, vector<4x4xf32>
    %cst_54 = arith.constant dense<0.000000e+00> : vector<4x32xf32>
    %67 = tpu.matmul %66, %65, %cst_54 {dimension_numbers = #tpu.dot_dimension_numbers<[1], [0], [0], [1], [0, 0, 1, 1], [], []>} : vector<4x4xf32>, vector<4x32xf32>, vector<4x32xf32> -> vector<4x32xf32>
    %c0_55 = arith.constant 0 : index
    %c0_56 = arith.constant 0 : index
    %68 = vector.load %arg4[%c0_55, %c0_56] : memref<4x4xf32, #tpu.memory_space<vmem>>, vector<4x4xf32>
    %cst_57 = arith.constant dense<0.000000e+00> : vector<4x32xf32>
    %69 = tpu.matmul %68, %65, %cst_57 {dimension_numbers = #tpu.dot_dimension_numbers<[1], [0], [0], [1], [0, 0, 1, 1], [], []>} : vector<4x4xf32>, vector<4x32xf32>, vector<4x32xf32> -> vector<4x32xf32>
    %c0_58 = arith.constant 0 : index
    %c0_59 = arith.constant 0 : index
    %70 = vector.load %arg26[%c0_58, %c0_59] : memref<32x32xf32, #tpu.memory_space<vmem>>, vector<32x32xf32>
    %c0_60 = arith.constant 0 : index
    %c0_61 = arith.constant 0 : index
    %71 = vector.load %arg27[%c0_60, %c0_61] : memref<32x32xf32, #tpu.memory_space<vmem>>, vector<32x32xf32>
    %c0_62 = arith.constant 0 : index
    %c0_63 = arith.constant 0 : index
    %72 = vector.load %arg28[%c0_62, %c0_63] : memref<1x32xf32, #tpu.memory_space<vmem>>, vector<1x32xf32>
    %cst_64 = arith.constant dense<0.000000e+00> : vector<4x32xf32>
    %73 = tpu.matmul %64, %70, %cst_64 {dimension_numbers = #tpu.dot_dimension_numbers<[1], [0], [0], [1], [0, 0, 1, 1], [], []>} : vector<4x32xf32>, vector<32x32xf32>, vector<4x32xf32> -> vector<4x32xf32>
    %cst_65 = arith.constant dense<0.000000e+00> : vector<4x32xf32>
    %74 = tpu.matmul %67, %71, %cst_65 {dimension_numbers = #tpu.dot_dimension_numbers<[1], [0], [0], [1], [0, 0, 1, 1], [], []>} : vector<4x32xf32>, vector<32x32xf32>, vector<4x32xf32> -> vector<4x32xf32>
    %75 = arith.addf %73, %74 : vector<4x32xf32>
    %76 = vector.broadcast %72 : vector<1x32xf32> to vector<4x32xf32>
    %77 = arith.addf %75, %76 : vector<4x32xf32>
    %cst_66 = arith.constant dense<0.000000e+00> : vector<4x32xf32>
    %78 = tpu.matmul %77, %70, %cst_66 {dimension_numbers = #tpu.dot_dimension_numbers<[1], [0], [0], [1], [0, 0, 1, 1], [], []>} : vector<4x32xf32>, vector<32x32xf32>, vector<4x32xf32> -> vector<4x32xf32>
    %cst_67 = arith.constant dense<0.000000e+00> : vector<4x32xf32>
    %79 = tpu.matmul %69, %71, %cst_67 {dimension_numbers = #tpu.dot_dimension_numbers<[1], [0], [0], [1], [0, 0, 1, 1], [], []>} : vector<4x32xf32>, vector<32x32xf32>, vector<4x32xf32> -> vector<4x32xf32>
    %80 = arith.addf %78, %79 : vector<4x32xf32>
    %81 = vector.broadcast %72 : vector<1x32xf32> to vector<4x32xf32>
    %82 = arith.addf %80, %81 : vector<4x32xf32>
    %c0_68 = arith.constant 0 : index
    %c0_69 = arith.constant 0 : index
    %83 = vector.load %arg14[%c0_68, %c0_69] : memref<32x64xf32, #tpu.memory_space<vmem>>, vector<32x64xf32>
    %c0_70 = arith.constant 0 : index
    %c0_71 = arith.constant 0 : index
    %84 = vector.load %arg15[%c0_70, %c0_71] : memref<1x64xf32, #tpu.memory_space<vmem>>, vector<1x64xf32>
    %c0_72 = arith.constant 0 : index
    %c0_73 = arith.constant 0 : index
    %85 = vector.load %arg16[%c0_72, %c0_73] : memref<1x64xf32, #tpu.memory_space<vmem>>, vector<1x64xf32>
    %c0_74 = arith.constant 0 : index
    %c0_75 = arith.constant 0 : index
    %86 = vector.load %arg17[%c0_74, %c0_75] : memref<1x64xf32, #tpu.memory_space<vmem>>, vector<1x64xf32>
    %c0_76 = arith.constant 0 : index
    %c0_77 = arith.constant 0 : index
    %87 = vector.load %arg18[%c0_76, %c0_77] : memref<64x2xf32, #tpu.memory_space<vmem>>, vector<64x2xf32>
    %c0_78 = arith.constant 0 : index
    %c0_79 = arith.constant 0 : index
    %88 = vector.load %arg19[%c0_78, %c0_79] : memref<1x2xf32, #tpu.memory_space<vmem>>, vector<1x2xf32>
    %cst_80 = arith.constant dense<0.000000e+00> : vector<32x64xf32>
    %89 = tpu.matmul %56, %83, %cst_80 {dimension_numbers = #tpu.dot_dimension_numbers<[1], [0], [0], [1], [0, 0, 1, 1], [], []>} : vector<32x32xf32>, vector<32x64xf32>, vector<32x64xf32> -> vector<32x64xf32>
    %90 = vector.broadcast %84 : vector<1x64xf32> to vector<32x64xf32>
    %91 = arith.addf %89, %90 : vector<32x64xf32>
    %92 = vector.broadcast %85 : vector<1x64xf32> to vector<32x64xf32>
    %93 = arith.mulf %91, %92 : vector<32x64xf32>
    %94 = vector.broadcast %86 : vector<1x64xf32> to vector<32x64xf32>
    %95 = arith.addf %93, %94 : vector<32x64xf32>
    %cst_81 = arith.constant 0.000000e+00 : f32
    %96 = vector.broadcast %cst_81 : f32 to vector<32x64xf32>
    %97 = arith.maximumf %95, %96 : vector<32x64xf32>
    %cst_82 = arith.constant dense<0.000000e+00> : vector<32x2xf32>
    %98 = tpu.matmul %97, %87, %cst_82 {dimension_numbers = #tpu.dot_dimension_numbers<[1], [0], [0], [1], [0, 0, 1, 1], [], []>} : vector<32x64xf32>, vector<64x2xf32>, vector<32x2xf32> -> vector<32x2xf32>
    %99 = vector.broadcast %88 : vector<1x2xf32> to vector<32x2xf32>
    %100 = arith.addf %98, %99 : vector<32x2xf32>
    %c0_83 = arith.constant 0 : index
    %c0_84 = arith.constant 0 : index
    %101 = vector.load %arg3[%c0_83, %c0_84] : memref<32x2xf32, #tpu.memory_space<vmem>>, vector<32x2xf32>
    %102 = arith.addf %100, %101 : vector<32x2xf32>
    %cst_85 = arith.constant dense<0xFF800000> : vector<32xf32>
    %103 = vector.multi_reduction <maximumf>, %102, %cst_85 [1] : vector<32x2xf32> to vector<32xf32>
    %104 = vector.shape_cast %103 : vector<32xf32> to vector<32x1xf32>
    %105 = vector.broadcast %104 : vector<32x1xf32> to vector<32x2xf32>
    %106 = arith.subf %102, %105 : vector<32x2xf32>
    %107 = math.exp %106 : vector<32x2xf32>
    %cst_86 = arith.constant dense<0.000000e+00> : vector<32xf32>
    %108 = vector.multi_reduction <add>, %107, %cst_86 [1] : vector<32x2xf32> to vector<32xf32>
    %109 = vector.shape_cast %108 : vector<32xf32> to vector<32x1xf32>
    %110 = vector.broadcast %109 : vector<32x1xf32> to vector<32x2xf32>
    %111 = arith.divf %107, %110 : vector<32x2xf32>
    %112 = vector.extract_strided_slice %111 {offsets = [0, 1], sizes = [32, 1], strides = [1, 1]} : vector<32x2xf32> to vector<32x1xf32>
    %113 = vector.broadcast %112 : vector<32x1xf32> to vector<32x32xf32>
    %114 = arith.mulf %113, %34 : vector<32x32xf32>
    %cst_87 = arith.constant dense<0.000000e+00> : vector<4x32xf32>
    %115 = tpu.matmul %63, %114, %cst_87 {dimension_numbers = #tpu.dot_dimension_numbers<[1], [0], [0], [1], [0, 0, 1, 1], [], []>} : vector<4x32xf32>, vector<32x32xf32>, vector<4x32xf32> -> vector<4x32xf32>
    %cst_88 = arith.constant dense<0.000000e+00> : vector<4x1xf32>
    %116 = tpu.matmul %57, %112, %cst_88 {dimension_numbers = #tpu.dot_dimension_numbers<[1], [0], [0], [1], [0, 0, 1, 1], [], []>} : vector<4x32xf32>, vector<32x1xf32>, vector<4x1xf32> -> vector<4x1xf32>
    %cst_89 = arith.constant 9.99999993E-9 : f32
    %117 = vector.broadcast %cst_89 : f32 to vector<4x1xf32>
    %118 = arith.addf %116, %117 : vector<4x1xf32>
    %119 = arith.subf %59, %116 : vector<4x1xf32>
    %cst_90 = arith.constant 9.99999993E-9 : f32
    %120 = vector.broadcast %cst_90 : f32 to vector<4x1xf32>
    %121 = arith.addf %119, %120 : vector<4x1xf32>
    %122 = arith.addf %118, %121 : vector<4x1xf32>
    %123 = arith.divf %118, %122 : vector<4x1xf32>
    %cst_91 = arith.constant 4.000000e-01 : f32
    %124 = vector.broadcast %cst_91 : f32 to vector<4x1xf32>
    %125 = arith.subf %123, %124 : vector<4x1xf32>
    %126 = math.absf %125 : vector<4x1xf32>
    %cst_92 = arith.constant dense<0.000000e+00> : vector<1xf32>
    %127 = vector.multi_reduction <add>, %126, %cst_92 [0] : vector<4x1xf32> to vector<1xf32>
    %128 = vector.shape_cast %127 : vector<1xf32> to vector<1x1xf32>
    %cst_93 = arith.constant 4.000000e+00 : f32
    %129 = vector.broadcast %cst_93 : f32 to vector<1x1xf32>
    %130 = arith.divf %128, %129 : vector<1x1xf32>
    %131 = tpu.iota {dimensions = array<i32: 0>} : vector<12x4xi32>
    %132 = tpu.iota {dimensions = array<i32: 1>} : vector<12x4xi32>
    %133 = arith.cmpi eq, %131, %132 : vector<12x4xi32>
    %134 = arith.extui %133 : vector<12x4xi1> to vector<12x4xi32>
    %135 = arith.sitofp %134 : vector<12x4xi32> to vector<12x4xf32>
    %c4_i32 = arith.constant 4 : i32
    %136 = vector.broadcast %c4_i32 : i32 to vector<12x4xi32>
    %137 = arith.addi %132, %136 : vector<12x4xi32>
    %138 = arith.cmpi eq, %131, %137 : vector<12x4xi32>
    %139 = arith.extui %138 : vector<12x4xi1> to vector<12x4xi32>
    %140 = arith.sitofp %139 : vector<12x4xi32> to vector<12x4xf32>
    %c8_i32 = arith.constant 8 : i32
    %141 = vector.broadcast %c8_i32 : i32 to vector<12x4xi32>
    %142 = arith.addi %132, %141 : vector<12x4xi32>
    %143 = arith.cmpi eq, %131, %142 : vector<12x4xi32>
    %144 = arith.extui %143 : vector<12x4xi1> to vector<12x4xi32>
    %145 = arith.sitofp %144 : vector<12x4xi32> to vector<12x4xf32>
    %cst_94 = arith.constant dense<0.000000e+00> : vector<12x32xf32>
    %146 = tpu.matmul %135, %64, %cst_94 {dimension_numbers = #tpu.dot_dimension_numbers<[1], [0], [0], [1], [0, 0, 1, 1], [], []>} : vector<12x4xf32>, vector<4x32xf32>, vector<12x32xf32> -> vector<12x32xf32>
    %cst_95 = arith.constant dense<0.000000e+00> : vector<12x32xf32>
    %147 = tpu.matmul %140, %77, %cst_95 {dimension_numbers = #tpu.dot_dimension_numbers<[1], [0], [0], [1], [0, 0, 1, 1], [], []>} : vector<12x4xf32>, vector<4x32xf32>, vector<12x32xf32> -> vector<12x32xf32>
    %148 = arith.addf %146, %147 : vector<12x32xf32>
    %cst_96 = arith.constant dense<0.000000e+00> : vector<12x32xf32>
    %149 = tpu.matmul %145, %115, %cst_96 {dimension_numbers = #tpu.dot_dimension_numbers<[1], [0], [0], [1], [0, 0, 1, 1], [], []>} : vector<12x4xf32>, vector<4x32xf32>, vector<12x32xf32> -> vector<12x32xf32>
    %150 = arith.addf %148, %149 : vector<12x32xf32>
    %c0_97 = arith.constant 0 : index
    %c0_98 = arith.constant 0 : index
    %151 = vector.load %arg20[%c0_97, %c0_98] : memref<32x64xf32, #tpu.memory_space<vmem>>, vector<32x64xf32>
    %c0_99 = arith.constant 0 : index
    %c0_100 = arith.constant 0 : index
    %152 = vector.load %arg21[%c0_99, %c0_100] : memref<1x64xf32, #tpu.memory_space<vmem>>, vector<1x64xf32>
    %c0_101 = arith.constant 0 : index
    %c0_102 = arith.constant 0 : index
    %153 = vector.load %arg22[%c0_101, %c0_102] : memref<1x64xf32, #tpu.memory_space<vmem>>, vector<1x64xf32>
    %c0_103 = arith.constant 0 : index
    %c0_104 = arith.constant 0 : index
    %154 = vector.load %arg23[%c0_103, %c0_104] : memref<1x64xf32, #tpu.memory_space<vmem>>, vector<1x64xf32>
    %c0_105 = arith.constant 0 : index
    %c0_106 = arith.constant 0 : index
    %155 = vector.load %arg24[%c0_105, %c0_106] : memref<64x128xf32, #tpu.memory_space<vmem>>, vector<64x128xf32>
    %c0_107 = arith.constant 0 : index
    %c0_108 = arith.constant 0 : index
    %156 = vector.load %arg25[%c0_107, %c0_108] : memref<1x128xf32, #tpu.memory_space<vmem>>, vector<1x128xf32>
    %cst_109 = arith.constant dense<0.000000e+00> : vector<12x64xf32>
    %157 = tpu.matmul %150, %151, %cst_109 {dimension_numbers = #tpu.dot_dimension_numbers<[1], [0], [0], [1], [0, 0, 1, 1], [], []>} : vector<12x32xf32>, vector<32x64xf32>, vector<12x64xf32> -> vector<12x64xf32>
    %158 = vector.broadcast %152 : vector<1x64xf32> to vector<12x64xf32>
    %159 = arith.addf %157, %158 : vector<12x64xf32>
    %160 = vector.broadcast %153 : vector<1x64xf32> to vector<12x64xf32>
    %161 = arith.mulf %159, %160 : vector<12x64xf32>
    %162 = vector.broadcast %154 : vector<1x64xf32> to vector<12x64xf32>
    %163 = arith.addf %161, %162 : vector<12x64xf32>
    %cst_110 = arith.constant 0.000000e+00 : f32
    %164 = vector.broadcast %cst_110 : f32 to vector<12x64xf32>
    %165 = arith.maximumf %163, %164 : vector<12x64xf32>
    %cst_111 = arith.constant dense<0.000000e+00> : vector<12x128xf32>
    %166 = tpu.matmul %165, %155, %cst_111 {dimension_numbers = #tpu.dot_dimension_numbers<[1], [0], [0], [1], [0, 0, 1, 1], [], []>} : vector<12x64xf32>, vector<64x128xf32>, vector<12x128xf32> -> vector<12x128xf32>
    %167 = vector.broadcast %156 : vector<1x128xf32> to vector<12x128xf32>
    %168 = arith.addf %166, %167 : vector<12x128xf32>
    %c0_112 = arith.constant 0 : index
    %c0_113 = arith.constant 0 : index
    %169 = vector.load %arg39[%c0_112, %c0_113] : memref<12x128xf32, #tpu.memory_space<vmem>>, vector<12x128xf32>
    tpu.vector_store %arg39[%c0_112, %c0_113], %168 {strides = array<i32>} : memref<12x128xf32, #tpu.memory_space<vmem>>, vector<12x128xf32>,
    %c0_114 = arith.constant 0 : index
    %c0_115 = arith.constant 0 : index
    %170 = vector.load %arg7[%c0_114, %c0_115] : memref<16x4xf32, #tpu.memory_space<vmem>>, vector<16x4xf32>
    %c0_116 = arith.constant 0 : index
    %c0_117 = arith.constant 0 : index
    %171 = vector.load %arg8[%c0_116, %c0_117] : memref<16x4xf32, #tpu.memory_space<vmem>>, vector<16x4xf32>
    %c0_118 = arith.constant 0 : index
    %c0_119 = arith.constant 0 : index
    %172 = vector.load %arg9[%c0_118, %c0_119] : memref<4x16xf32, #tpu.memory_space<vmem>>, vector<4x16xf32>
    %c0_120 = arith.constant 0 : index
    %c0_121 = arith.constant 0 : index
    %173 = vector.load %arg29[%c0_120, %c0_121] : memref<32x32xf32, #tpu.memory_space<vmem>>, vector<32x32xf32>
    %c0_122 = arith.constant 0 : index
    %c0_123 = arith.constant 0 : index
    %174 = vector.load %arg30[%c0_122, %c0_123] : memref<32x32xf32, #tpu.memory_space<vmem>>, vector<32x32xf32>
    %c0_124 = arith.constant 0 : index
    %c0_125 = arith.constant 0 : index
    %175 = vector.load %arg31[%c0_124, %c0_125] : memref<1x32xf32, #tpu.memory_space<vmem>>, vector<1x32xf32>
    %c0_126 = arith.constant 0 : index
    %c0_127 = arith.constant 0 : index
    %176 = vector.load %arg32[%c0_126, %c0_127] : memref<32x1xf32, #tpu.memory_space<vmem>>, vector<32x1xf32>
    %c0_128 = arith.constant 0 : index
    %c0_129 = arith.constant 0 : index
    %177 = vector.load %arg33[%c0_128, %c0_129] : memref<1x1xf32, #tpu.memory_space<vmem>>, vector<1x1xf32>
    %cst_130 = arith.constant dense<0.000000e+00> : vector<4x32xf32>
    %178 = tpu.matmul %64, %173, %cst_130 {dimension_numbers = #tpu.dot_dimension_numbers<[1], [0], [0], [1], [0, 0, 1, 1], [], []>} : vector<4x32xf32>, vector<32x32xf32>, vector<4x32xf32> -> vector<4x32xf32>
    %cst_131 = arith.constant dense<0.000000e+00> : vector<4x32xf32>
    %179 = tpu.matmul %82, %174, %cst_131 {dimension_numbers = #tpu.dot_dimension_numbers<[1], [0], [0], [1], [0, 0, 1, 1], [], []>} : vector<4x32xf32>, vector<32x32xf32>, vector<4x32xf32> -> vector<4x32xf32>
    %180 = arith.addf %178, %179 : vector<4x32xf32>
    %181 = vector.broadcast %175 : vector<1x32xf32> to vector<4x32xf32>
    %182 = arith.addf %180, %181 : vector<4x32xf32>
    %cst_132 = arith.constant 0.000000e+00 : f32
    %183 = vector.broadcast %cst_132 : f32 to vector<4x32xf32>
    %184 = arith.maximumf %182, %183 : vector<4x32xf32>
    %cst_133 = arith.constant dense<0.000000e+00> : vector<4x1xf32>
    %185 = tpu.matmul %184, %176, %cst_133 {dimension_numbers = #tpu.dot_dimension_numbers<[1], [0], [0], [1], [0, 0, 1, 1], [], []>} : vector<4x32xf32>, vector<32x1xf32>, vector<4x1xf32> -> vector<4x1xf32>
    %186 = vector.broadcast %177 : vector<1x1xf32> to vector<4x1xf32>
    %187 = arith.addf %185, %186 : vector<4x1xf32>
    %cst_134 = arith.constant 2.000000e+01 : f32
    %188 = vector.broadcast %cst_134 : f32 to vector<4x1xf32>
    %189 = arith.cmpf ogt, %187, %188 : vector<4x1xf32>
    %cst_135 = arith.constant 2.000000e+01 : f32
    %190 = vector.broadcast %cst_135 : f32 to vector<4x1xf32>
    %191 = arith.minimumf %187, %190 : vector<4x1xf32>
    %192 = math.exp %191 : vector<4x1xf32>
    %193 = math.log1p %192 : vector<4x1xf32>
    %194 = arith.select %189, %187, %193 : vector<4x1xi1>, vector<4x1xf32>
    %cst_136 = arith.constant dense<0.000000e+00> : vector<16x32xf32>
    %195 = tpu.matmul %170, %178, %cst_136 {dimension_numbers = #tpu.dot_dimension_numbers<[1], [0], [0], [1], [0, 0, 1, 1], [], []>} : vector<16x4xf32>, vector<4x32xf32>, vector<16x32xf32> -> vector<16x32xf32>
    %cst_137 = arith.constant dense<0.000000e+00> : vector<16x32xf32>
    %196 = tpu.matmul %171, %179, %cst_137 {dimension_numbers = #tpu.dot_dimension_numbers<[1], [0], [0], [1], [0, 0, 1, 1], [], []>} : vector<16x4xf32>, vector<4x32xf32>, vector<16x32xf32> -> vector<16x32xf32>
    %197 = arith.addf %195, %196 : vector<16x32xf32>
    %198 = vector.broadcast %175 : vector<1x32xf32> to vector<16x32xf32>
    %199 = arith.addf %197, %198 : vector<16x32xf32>
    %cst_138 = arith.constant 0.000000e+00 : f32
    %200 = vector.broadcast %cst_138 : f32 to vector<16x32xf32>
    %201 = arith.maximumf %199, %200 : vector<16x32xf32>
    %cst_139 = arith.constant dense<0.000000e+00> : vector<16x1xf32>
    %202 = tpu.matmul %201, %176, %cst_139 {dimension_numbers = #tpu.dot_dimension_numbers<[1], [0], [0], [1], [0, 0, 1, 1], [], []>} : vector<16x32xf32>, vector<32x1xf32>, vector<16x1xf32> -> vector<16x1xf32>
    %203 = vector.broadcast %177 : vector<1x1xf32> to vector<16x1xf32>
    %204 = arith.addf %202, %203 : vector<16x1xf32>
    %cst_140 = arith.constant 2.000000e+01 : f32
    %205 = vector.broadcast %cst_140 : f32 to vector<16x1xf32>
    %206 = arith.cmpf ogt, %204, %205 : vector<16x1xf32>
    %cst_141 = arith.constant 2.000000e+01 : f32
    %207 = vector.broadcast %cst_141 : f32 to vector<16x1xf32>
    %208 = arith.minimumf %204, %207 : vector<16x1xf32>
    %209 = math.exp %208 : vector<16x1xf32>
    %210 = math.log1p %209 : vector<16x1xf32>
    %211 = arith.select %206, %204, %210 : vector<16x1xi1>, vector<16x1xf32>
    %cst_142 = arith.constant dense<0xFF800000> : vector<1xf32>
    %212 = vector.multi_reduction <maximumf>, %211, %cst_142 [0] : vector<16x1xf32> to vector<1xf32>
    %213 = vector.shape_cast %212 : vector<1xf32> to vector<1x1xf32>
    %214 = vector.broadcast %213 : vector<1x1xf32> to vector<16x1xf32>
    %215 = arith.subf %211, %214 : vector<16x1xf32>
    %216 = math.exp %215 : vector<16x1xf32>
    %cst_143 = arith.constant dense<0.000000e+00> : vector<4x1xf32>
    %217 = tpu.matmul %172, %216, %cst_143 {dimension_numbers = #tpu.dot_dimension_numbers<[1], [0], [0], [1], [0, 0, 1, 1], [], []>} : vector<4x16xf32>, vector<16x1xf32>, vector<4x1xf32> -> vector<4x1xf32>
    %cst_144 = arith.constant 1.000000e-30 : f32
    %218 = vector.broadcast %cst_144 : f32 to vector<4x1xf32>
    %219 = arith.maximumf %217, %218 : vector<4x1xf32>
    %220 = math.log %219 : vector<4x1xf32>
    %221 = vector.broadcast %213 : vector<1x1xf32> to vector<4x1xf32>
    %222 = arith.addf %220, %221 : vector<4x1xf32>
    %cst_145 = arith.constant dense<0.000000e+00> : vector<1xf32>
    %223 = vector.multi_reduction <add>, %194, %cst_145 [0] : vector<4x1xf32> to vector<1xf32>
    %224 = vector.shape_cast %223 : vector<1xf32> to vector<1x1xf32>
    %cst_146 = arith.constant 4.000000e+00 : f32
    %225 = vector.broadcast %cst_146 : f32 to vector<1x1xf32>
    %226 = arith.divf %224, %225 : vector<1x1xf32>
    %cst_147 = arith.constant dense<0.000000e+00> : vector<1xf32>
    %227 = vector.multi_reduction <add>, %222, %cst_147 [0] : vector<4x1xf32> to vector<1xf32>
    %228 = vector.shape_cast %227 : vector<1xf32> to vector<1x1xf32>
    %cst_148 = arith.constant 4.000000e+00 : f32
    %229 = vector.broadcast %cst_148 : f32 to vector<1x1xf32>
    %230 = arith.divf %228, %229 : vector<1x1xf32>
    %cst_149 = arith.constant 1.38629436 : f32
    %231 = vector.broadcast %cst_149 : f32 to vector<1x1xf32>
    %232 = arith.subf %230, %231 : vector<1x1xf32>
    %233 = arith.subf %226, %232 : vector<1x1xf32>
    %cst_150 = arith.constant 0.000000e+00 : f32
    %234 = vector.broadcast %cst_150 : f32 to vector<1x1xf32>
    %235 = arith.subf %234, %233 : vector<1x1xf32>
    %c0_151 = arith.constant 0 : index
    %c0_152 = arith.constant 0 : index
    %236 = vector.load %arg34[%c0_151, %c0_152] : memref<32x32xf32, #tpu.memory_space<vmem>>, vector<32x32xf32>
    %c0_153 = arith.constant 0 : index
    %c0_154 = arith.constant 0 : index
    %237 = vector.load %arg35[%c0_153, %c0_154] : memref<32x32xf32, #tpu.memory_space<vmem>>, vector<32x32xf32>
    %c0_155 = arith.constant 0 : index
    %c0_156 = arith.constant 0 : index
    %238 = vector.load %arg36[%c0_155, %c0_156] : memref<1x32xf32, #tpu.memory_space<vmem>>, vector<1x32xf32>
    %c0_157 = arith.constant 0 : index
    %c0_158 = arith.constant 0 : index
    %239 = vector.load %arg37[%c0_157, %c0_158] : memref<32x1xf32, #tpu.memory_space<vmem>>, vector<32x1xf32>
    %c0_159 = arith.constant 0 : index
    %c0_160 = arith.constant 0 : index
    %240 = vector.load %arg38[%c0_159, %c0_160] : memref<1x1xf32, #tpu.memory_space<vmem>>, vector<1x1xf32>
    %cst_161 = arith.constant dense<0.000000e+00> : vector<4x32xf32>
    %241 = tpu.matmul %64, %236, %cst_161 {dimension_numbers = #tpu.dot_dimension_numbers<[1], [0], [0], [1], [0, 0, 1, 1], [], []>} : vector<4x32xf32>, vector<32x32xf32>, vector<4x32xf32> -> vector<4x32xf32>
    %cst_162 = arith.constant dense<0.000000e+00> : vector<4x32xf32>
    %242 = tpu.matmul %115, %237, %cst_162 {dimension_numbers = #tpu.dot_dimension_numbers<[1], [0], [0], [1], [0, 0, 1, 1], [], []>} : vector<4x32xf32>, vector<32x32xf32>, vector<4x32xf32> -> vector<4x32xf32>
    %243 = arith.addf %241, %242 : vector<4x32xf32>
    %244 = vector.broadcast %238 : vector<1x32xf32> to vector<4x32xf32>
    %245 = arith.addf %243, %244 : vector<4x32xf32>
    %cst_163 = arith.constant 0.000000e+00 : f32
    %246 = vector.broadcast %cst_163 : f32 to vector<4x32xf32>
    %247 = arith.maximumf %245, %246 : vector<4x32xf32>
    %cst_164 = arith.constant dense<0.000000e+00> : vector<4x1xf32>
    %248 = tpu.matmul %247, %239, %cst_164 {dimension_numbers = #tpu.dot_dimension_numbers<[1], [0], [0], [1], [0, 0, 1, 1], [], []>} : vector<4x32xf32>, vector<32x1xf32>, vector<4x1xf32> -> vector<4x1xf32>
    %249 = vector.broadcast %240 : vector<1x1xf32> to vector<4x1xf32>
    %250 = arith.addf %248, %249 : vector<4x1xf32>
    %cst_165 = arith.constant 2.000000e+01 : f32
    %251 = vector.broadcast %cst_165 : f32 to vector<4x1xf32>
    %252 = arith.cmpf ogt, %250, %251 : vector<4x1xf32>
    %cst_166 = arith.constant 2.000000e+01 : f32
    %253 = vector.broadcast %cst_166 : f32 to vector<4x1xf32>
    %254 = arith.minimumf %250, %253 : vector<4x1xf32>
    %255 = math.exp %254 : vector<4x1xf32>
    %256 = math.log1p %255 : vector<4x1xf32>
    %257 = arith.select %252, %250, %256 : vector<4x1xi1>, vector<4x1xf32>
    %cst_167 = arith.constant dense<0.000000e+00> : vector<16x32xf32>
    %258 = tpu.matmul %170, %241, %cst_167 {dimension_numbers = #tpu.dot_dimension_numbers<[1], [0], [0], [1], [0, 0, 1, 1], [], []>} : vector<16x4xf32>, vector<4x32xf32>, vector<16x32xf32> -> vector<16x32xf32>
    %cst_168 = arith.constant dense<0.000000e+00> : vector<16x32xf32>
    %259 = tpu.matmul %171, %242, %cst_168 {dimension_numbers = #tpu.dot_dimension_numbers<[1], [0], [0], [1], [0, 0, 1, 1], [], []>} : vector<16x4xf32>, vector<4x32xf32>, vector<16x32xf32> -> vector<16x32xf32>
    %260 = arith.addf %258, %259 : vector<16x32xf32>
    %261 = vector.broadcast %238 : vector<1x32xf32> to vector<16x32xf32>
    %262 = arith.addf %260, %261 : vector<16x32xf32>
    %cst_169 = arith.constant 0.000000e+00 : f32
    %263 = vector.broadcast %cst_169 : f32 to vector<16x32xf32>
    %264 = arith.maximumf %262, %263 : vector<16x32xf32>
    %cst_170 = arith.constant dense<0.000000e+00> : vector<16x1xf32>
    %265 = tpu.matmul %264, %239, %cst_170 {dimension_numbers = #tpu.dot_dimension_numbers<[1], [0], [0], [1], [0, 0, 1, 1], [], []>} : vector<16x32xf32>, vector<32x1xf32>, vector<16x1xf32> -> vector<16x1xf32>
    %266 = vector.broadcast %240 : vector<1x1xf32> to vector<16x1xf32>
    %267 = arith.addf %265, %266 : vector<16x1xf32>
    %cst_171 = arith.constant 2.000000e+01 : f32
    %268 = vector.broadcast %cst_171 : f32 to vector<16x1xf32>
    %269 = arith.cmpf ogt, %267, %268 : vector<16x1xf32>
    %cst_172 = arith.constant 2.000000e+01 : f32
    %270 = vector.broadcast %cst_172 : f32 to vector<16x1xf32>
    %271 = arith.minimumf %267, %270 : vector<16x1xf32>
    %272 = math.exp %271 : vector<16x1xf32>
    %273 = math.log1p %272 : vector<16x1xf32>
    %274 = arith.select %269, %267, %273 : vector<16x1xi1>, vector<16x1xf32>
    %cst_173 = arith.constant dense<0xFF800000> : vector<1xf32>
    %275 = vector.multi_reduction <maximumf>, %274, %cst_173 [0] : vector<16x1xf32> to vector<1xf32>
    %276 = vector.shape_cast %275 : vector<1xf32> to vector<1x1xf32>
    %277 = vector.broadcast %276 : vector<1x1xf32> to vector<16x1xf32>
    %278 = arith.subf %274, %277 : vector<16x1xf32>
    %279 = math.exp %278 : vector<16x1xf32>
    %cst_174 = arith.constant dense<0.000000e+00> : vector<4x1xf32>
    %280 = tpu.matmul %172, %279, %cst_174 {dimension_numbers = #tpu.dot_dimension_numbers<[1], [0], [0], [1], [0, 0, 1, 1], [], []>} : vector<4x16xf32>, vector<16x1xf32>, vector<4x1xf32> -> vector<4x1xf32>
    %cst_175 = arith.constant 1.000000e-30 : f32
    %281 = vector.broadcast %cst_175 : f32 to vector<4x1xf32>
    %282 = arith.maximumf %280, %281 : vector<4x1xf32>
    %283 = math.log %282 : vector<4x1xf32>
    %284 = vector.broadcast %276 : vector<1x1xf32> to vector<4x1xf32>
    %285 = arith.addf %283, %284 : vector<4x1xf32>
    %cst_176 = arith.constant dense<0.000000e+00> : vector<1xf32>
    %286 = vector.multi_reduction <add>, %257, %cst_176 [0] : vector<4x1xf32> to vector<1xf32>
    %287 = vector.shape_cast %286 : vector<1xf32> to vector<1x1xf32>
    %cst_177 = arith.constant 4.000000e+00 : f32
    %288 = vector.broadcast %cst_177 : f32 to vector<1x1xf32>
    %289 = arith.divf %287, %288 : vector<1x1xf32>
    %cst_178 = arith.constant dense<0.000000e+00> : vector<1xf32>
    %290 = vector.multi_reduction <add>, %285, %cst_178 [0] : vector<4x1xf32> to vector<1xf32>
    %291 = vector.shape_cast %290 : vector<1xf32> to vector<1x1xf32>
    %cst_179 = arith.constant 4.000000e+00 : f32
    %292 = vector.broadcast %cst_179 : f32 to vector<1x1xf32>
    %293 = arith.divf %291, %292 : vector<1x1xf32>
    %cst_180 = arith.constant 1.38629436 : f32
    %294 = vector.broadcast %cst_180 : f32 to vector<1x1xf32>
    %295 = arith.subf %293, %294 : vector<1x1xf32>
    %296 = arith.subf %289, %295 : vector<1x1xf32>
    %cst_181 = arith.constant 0.000000e+00 : f32
    %297 = vector.broadcast %cst_181 : f32 to vector<1x1xf32>
    %298 = arith.subf %297, %296 : vector<1x1xf32>
    %299 = tpu.iota {dimensions = array<i32: 1>} : vector<1x128xi32>
    %c0_i32 = arith.constant 0 : i32
    %300 = vector.broadcast %c0_i32 : i32 to vector<1x128xi32>
    %301 = arith.cmpi eq, %299, %300 : vector<1x128xi32>
    %cst_182 = arith.constant 0.000000e+00 : f32
    %302 = vector.shape_cast %130 : vector<1x1xf32> to vector<1x1xf32>
    %303 = vector.broadcast %302 : vector<1x1xf32> to vector<1x128xf32>
    %304 = vector.broadcast %cst_182 : f32 to vector<1x128xf32>
    %305 = arith.select %301, %303, %304 : vector<1x128xi1>, vector<1x128xf32>
    %c1_i32 = arith.constant 1 : i32
    %306 = vector.broadcast %c1_i32 : i32 to vector<1x128xi32>
    %307 = arith.cmpi eq, %299, %306 : vector<1x128xi32>
    %cst_183 = arith.constant 0.000000e+00 : f32
    %308 = vector.shape_cast %235 : vector<1x1xf32> to vector<1x1xf32>
    %309 = vector.broadcast %308 : vector<1x1xf32> to vector<1x128xf32>
    %310 = vector.broadcast %cst_183 : f32 to vector<1x128xf32>
    %311 = arith.select %307, %309, %310 : vector<1x128xi1>, vector<1x128xf32>
    %312 = arith.addf %305, %311 : vector<1x128xf32>
    %c2_i32 = arith.constant 2 : i32
    %313 = vector.broadcast %c2_i32 : i32 to vector<1x128xi32>
    %314 = arith.cmpi eq, %299, %313 : vector<1x128xi32>
    %cst_184 = arith.constant 0.000000e+00 : f32
    %315 = vector.shape_cast %298 : vector<1x1xf32> to vector<1x1xf32>
    %316 = vector.broadcast %315 : vector<1x1xf32> to vector<1x128xf32>
    %317 = vector.broadcast %cst_184 : f32 to vector<1x128xf32>
    %318 = arith.select %314, %316, %317 : vector<1x128xi1>, vector<1x128xf32>
    %319 = arith.addf %312, %318 : vector<1x128xf32>
    %c0_185 = arith.constant 0 : index
    %c0_186 = arith.constant 0 : index
    %320 = vector.load %arg40[%c0_185, %c0_186] : memref<1x128xf32, #tpu.memory_space<vmem>>, vector<1x128xf32>
    tpu.vector_store %arg40[%c0_185, %c0_186], %319 {strides = array<i32>} : memref<1x128xf32, #tpu.memory_space<vmem>>, vector<1x128xf32>,
    return
  }
}

</mosaic_0001>

<llo_original>
// kernel: graph_c2r_forward.1
$region0: #{graph_c2r_forward.1}
  #allocation0 [shape = 'u32[]', space=smem, size = 0x4, offset = 0x4, fixed_abs, tag = 'smem constant byte address 0x4 - core index']
  #allocation1 [shape = 'u32[72,128]{1,0:T(1,128)}', space=vmem, size = 0x9000, scoped, tag = 'internal scratch']
  #allocation2 [shape = 'f32[1,1]{1,0:T(1,128)S(1)}', space=vmem, size = 0x200, scoped, tag = 'scoped memory for graph_c2r_forward.1']
  #allocation3 [shape = 'f32[1,1]{1,0:T(1,128)S(1)}', space=vmem, size = 0x200, scoped, tag = 'scoped memory for graph_c2r_forward.1']
  %s0 = inlined_call_operand.smem [shape: u32[41], index: -1, kind: input, shape index: {}]
  %s1 = sld [smem:[%s0]]
  %s2 = scalar_lea.smem %s0, 1
  %s3 = sld [smem:[%s2]]
  %s4 = scalar_lea.smem %s0, 2
  %s5 = sld [smem:[%s4]]
  %s6 = scalar_lea.smem %s0, 3
  %s7 = sld [smem:[%s6]]
  %s8 = scalar_lea.smem %s0, 4
  %s9 = sld [smem:[%s8]]
  %s10 = scalar_lea.smem %s0, 5
  %s11 = sld [smem:[%s10]]
  %s12 = scalar_lea.smem %s0, 6
  %s13 = sld [smem:[%s12]]
  %s14 = scalar_lea.smem %s0, 7
  %s15 = sld [smem:[%s14]]
  %s16 = scalar_lea.smem %s0, 8
  %s17 = sld [smem:[%s16]]
  %s18 = scalar_lea.smem %s0, 9
  %s19 = sld [smem:[%s18]]
  %s20 = scalar_lea.smem %s0, 10
  %s21 = sld [smem:[%s20]]
  %s22 = scalar_lea.smem %s0, 11
  %s23 = sld [smem:[%s22]]
  %s24 = scalar_lea.smem %s0, 12
  %s25 = sld [smem:[%s24]]
  %s26 = scalar_lea.smem %s0, 13
  %s27 = sld [smem:[%s26]]
  %s28 = scalar_lea.smem %s0, 14
  %s29 = sld [smem:[%s28]]
  %s30 = scalar_lea.smem %s0, 15
  %s31 = sld [smem:[%s30]]
  %s32 = scalar_lea.smem %s0, 16
  %s33 = sld [smem:[%s32]]
  %s34 = scalar_lea.smem %s0, 17
  %s35 = sld [smem:[%s34]]
  %s36 = scalar_lea.smem %s0, 18
  %s37 = sld [smem:[%s36]]
  %s38 = scalar_lea.smem %s0, 19
  %s39 = sld [smem:[%s38]]
  %s40 = scalar_lea.smem %s0, 20
  %s41 = sld [smem:[%s40]]
  %s42 = scalar_lea.smem %s0, 21
  %s43 = sld [smem:[%s42]]
  %s44 = scalar_lea.smem %s0, 22
  %s45 = sld [smem:[%s44]]
  %s46 = scalar_lea.smem %s0, 23
  %s47 = sld [smem:[%s46]]
  %s48 = scalar_lea.smem %s0, 24
  %s49 = sld [smem:[%s48]]
  %s50 = scalar_lea.smem %s0, 25
  %s51 = sld [smem:[%s50]]
  %s52 = scalar_lea.smem %s0, 26
  %s53 = sld [smem:[%s52]]
  %s54 = scalar_lea.smem %s0, 27
  %s55 = sld [smem:[%s54]]
  %s56 = scalar_lea.smem %s0, 28
  %s57 = sld [smem:[%s56]]
  %s58 = scalar_lea.smem %s0, 29
  %s59 = sld [smem:[%s58]]
  %s60 = scalar_lea.smem %s0, 30
  %s61 = sld [smem:[%s60]]
  %s62 = scalar_lea.smem %s0, 31
  %s63 = sld [smem:[%s62]]
  %s64 = scalar_lea.smem %s0, 32
  %s65 = sld [smem:[%s64]]
  %s66 = scalar_lea.smem %s0, 33
  %s67 = sld [smem:[%s66]]
  %s68 = scalar_lea.smem %s0, 34
  %s69 = sld [smem:[%s68]]
  %s70 = scalar_lea.smem %s0, 35
  %s71 = sld [smem:[%s70]]
  %s72 = scalar_lea.smem %s0, 36
  %s73 = sld [smem:[%s72]]
  %s74 = scalar_lea.smem %s0, 37
  %s75 = sld [smem:[%s74]]
  %s76 = scalar_lea.smem %s0, 38
  %s77 = sld [smem:[%s76]]
  %s78 = scalar_lea.smem %s0, 39
  %s79 = sld [smem:[%s78]]
  %s80 = scalar_lea.smem %s0, 40
  %s81 = sld [smem:[%s80]]
  %82 = xla_tuple %s79, %s81
  %s83 = sld [smem:[#allocation0]]
  $region174: #{graph_c2r_forward.1} parent=0
    _
  %s85 = ssub.s32 1, %s83
  %s86 = scalar_select 0, %s85, %s83
  %v87 = vstv %s67
  %88 = vst [vmem:[#allocation2] sm:$0x1] %v87
  %v89 = vstv %s77
  %90 = vst [vmem:[#allocation3] sm:$0x1] %v89
  // Predicated region
  $region2: #{graph_c2r_forward.1} parent=0 // pred_check
    _
  $region3: #{graph_c2r_forward.1} parent=0 // pred_check_branch
    %92 = sbr.rel (0) target = $region5
  $region4: #{graph_c2r_forward.1} parent=0 // pred_region
    _
  $region5: #{graph_c2r_forward.1} parent=0 // pred_fallthru
    _
  // Predicated region
  $region6: #{graph_c2r_forward.1} parent=0 // pred_check
    _
  $region7: #{graph_c2r_forward.1} parent=0 // pred_check_branch
    %94 = sbr.rel (0) target = $region9
  $region8: #{graph_c2r_forward.1} parent=0 // pred_region
    _
  $region9: #{graph_c2r_forward.1} parent=0 // pred_fallthru
    _
  // Predicated region
  $region10: #{graph_c2r_forward.1} parent=0 // pred_check
    _
  $region11: #{graph_c2r_forward.1} parent=0 // pred_check_branch
    %96 = sbr.rel (0) target = $region13
  $region12: #{graph_c2r_forward.1} parent=0 // pred_region
    _
  $region13: #{graph_c2r_forward.1} parent=0 // pred_fallthru
    _
  // Predicated region
  $region14: #{graph_c2r_forward.1} parent=0 // pred_check
    _
  $region15: #{graph_c2r_forward.1} parent=0 // pred_check_branch
    %98 = sbr.rel (0) target = $region17
  $region16: #{graph_c2r_forward.1} parent=0 // pred_region
    _
  $region17: #{graph_c2r_forward.1} parent=0 // pred_fallthru
    _
  // Predicated region
  $region18: #{graph_c2r_forward.1} parent=0 // pred_check
    _
  $region19: #{graph_c2r_forward.1} parent=0 // pred_check_branch
    %100 = sbr.rel (0) target = $region21
  $region20: #{graph_c2r_forward.1} parent=0 // pred_region
    _
  $region21: #{graph_c2r_forward.1} parent=0 // pred_fallthru
    _
  // Predicated region
  $region22: #{graph_c2r_forward.1} parent=0 // pred_check
    _
  $region23: #{graph_c2r_forward.1} parent=0 // pred_check_branch
    %102 = sbr.rel (0) target = $region25
  $region24: #{graph_c2r_forward.1} parent=0 // pred_region
    _
  $region25: #{graph_c2r_forward.1} parent=0 // pred_fallthru
    _
  // Predicated region
  $region26: #{graph_c2r_forward.1} parent=0 // pred_check
    _
  $region27: #{graph_c2r_forward.1} parent=0 // pred_check_branch
    %104 = sbr.rel (0) target = $region29
  $region28: #{graph_c2r_forward.1} parent=0 // pred_region
    _
  $region29: #{graph_c2r_forward.1} parent=0 // pred_fallthru
    _
  // Predicated region
  $region30: #{graph_c2r_forward.1} parent=0 // pred_check
    _
  $region31: #{graph_c2r_forward.1} parent=0 // pred_check_branch
    %106 = sbr.rel (0) target = $region33
  $region32: #{graph_c2r_forward.1} parent=0 // pred_region
    _
  $region33: #{graph_c2r_forward.1} parent=0 // pred_fallthru
    _
  // Predicated region
  $region34: #{graph_c2r_forward.1} parent=0 // pred_check
    _
  $region35: #{graph_c2r_forward.1} parent=0 // pred_check_branch
    %108 = sbr.rel (0) target = $region37
  $region36: #{graph_c2r_forward.1} parent=0 // pred_region
    _
  $region37: #{graph_c2r_forward.1} parent=0 // pred_fallthru
    _
  // Predicated region
  $region38: #{graph_c2r_forward.1} parent=0 // pred_check
    _
  $region39: #{graph_c2r_forward.1} parent=0 // pred_check_branch
    %110 = sbr.rel (0) target = $region41
  $region40: #{graph_c2r_forward.1} parent=0 // pred_region
    _
  $region41: #{graph_c2r_forward.1} parent=0 // pred_fallthru
    _
  // Predicated region
  $region42: #{graph_c2r_forward.1} parent=0 // pred_check
    _
  $region43: #{graph_c2r_forward.1} parent=0 // pred_check_branch
    %112 = sbr.rel (0) target = $region45
  $region44: #{graph_c2r_forward.1} parent=0 // pred_region
    _
  $region45: #{graph_c2r_forward.1} parent=0 // pred_fallthru
    _
  // Predicated region
  $region46: #{graph_c2r_forward.1} parent=0 // pred_check
    _
  $region47: #{graph_c2r_forward.1} parent=0 // pred_check_branch
    %114 = sbr.rel (0) target = $region49
  $region48: #{graph_c2r_forward.1} parent=0 // pred_region
    _
  $region49: #{graph_c2r_forward.1} parent=0 // pred_fallthru
    _
  // Predicated region
  $region50: #{graph_c2r_forward.1} parent=0 // pred_check
    _
  $region51: #{graph_c2r_forward.1} parent=0 // pred_check_branch
    %116 = sbr.rel (0) target = $region53
  $region52: #{graph_c2r_forward.1} parent=0 // pred_region
    _
  $region53: #{graph_c2r_forward.1} parent=0 // pred_fallthru
    _
  // Predicated region
  $region54: #{graph_c2r_forward.1} parent=0 // pred_check
    _
  $region55: #{graph_c2r_forward.1} parent=0 // pred_check_branch
    %118 = sbr.rel (0) target = $region57
  $region56: #{graph_c2r_forward.1} parent=0 // pred_region
    _
  $region57: #{graph_c2r_forward.1} parent=0 // pred_fallthru
    _
  // Predicated region
  $region58: #{graph_c2r_forward.1} parent=0 // pred_check
    _
  $region59: #{graph_c2r_forward.1} parent=0 // pred_check_branch
    %120 = sbr.rel (0) target = $region61
  $region60: #{graph_c2r_forward.1} parent=0 // pred_region
    _
  $region61: #{graph_c2r_forward.1} parent=0 // pred_fallthru
    _
  // Predicated region
  $region62: #{graph_c2r_forward.1} parent=0 // pred_check
    _
  $region63: #{graph_c2r_forward.1} parent=0 // pred_check_branch
    %122 = sbr.rel (0) target = $region65
  $region64: #{graph_c2r_forward.1} parent=0 // pred_region
    _
  $region65: #{graph_c2r_forward.1} parent=0 // pred_fallthru
    _
  // Predicated region
  $region66: #{graph_c2r_forward.1} parent=0 // pred_check
    _
  $region67: #{graph_c2r_forward.1} parent=0 // pred_check_branch
    %124 = sbr.rel (0) target = $region69
  $region68: #{graph_c2r_forward.1} parent=0 // pred_region
    _
  $region69: #{graph_c2r_forward.1} parent=0 // pred_fallthru
    _
  // Predicated region
  $region70: #{graph_c2r_forward.1} parent=0 // pred_check
    _
  $region71: #{graph_c2r_forward.1} parent=0 // pred_check_branch
    %126 = sbr.rel (0) target = $region73
  $region72: #{graph_c2r_forward.1} parent=0 // pred_region
    _
  $region73: #{graph_c2r_forward.1} parent=0 // pred_fallthru
    _
  // Predicated region
  $region74: #{graph_c2r_forward.1} parent=0 // pred_check
    _
  $region75: #{graph_c2r_forward.1} parent=0 // pred_check_branch
    %128 = sbr.rel (0) target = $region77
  $region76: #{graph_c2r_forward.1} parent=0 // pred_region
    _
  $region77: #{graph_c2r_forward.1} parent=0 // pred_fallthru
    _
  // Predicated region
  $region78: #{graph_c2r_forward.1} parent=0 // pred_check
    _
  $region79: #{graph_c2r_forward.1} parent=0 // pred_check_branch
    %130 = sbr.rel (0) target = $region81
  $region80: #{graph_c2r_forward.1} parent=0 // pred_region
    _
  $region81: #{graph_c2r_forward.1} parent=0 // pred_fallthru
    _
  // Predicated region
  $region82: #{graph_c2r_forward.1} parent=0 // pred_check
    _
  $region83: #{graph_c2r_forward.1} parent=0 // pred_check_branch
    %132 = sbr.rel (0) target = $region85
  $region84: #{graph_c2r_forward.1} parent=0 // pred_region
    _
  $region85: #{graph_c2r_forward.1} parent=0 // pred_fallthru
    _
  // Predicated region
  $region86: #{graph_c2r_forward.1} parent=0 // pred_check
    _
  $region87: #{graph_c2r_forward.1} parent=0 // pred_check_branch
    %134 = sbr.rel (0) target = $region89
  $region88: #{graph_c2r_forward.1} parent=0 // pred_region
    _
  $region89: #{graph_c2r_forward.1} parent=0 // pred_fallthru
    _
  // Predicated region
  $region90: #{graph_c2r_forward.1} parent=0 // pred_check
    _
  $region91: #{graph_c2r_forward.1} parent=0 // pred_check_branch
    %136 = sbr.rel (0) target = $region93
  $region92: #{graph_c2r_forward.1} parent=0 // pred_region
    _
  $region93: #{graph_c2r_forward.1} parent=0 // pred_fallthru
    _
  // Predicated region
  $region94: #{graph_c2r_forward.1} parent=0 // pred_check
    _
  $region95: #{graph_c2r_forward.1} parent=0 // pred_check_branch
    %138 = sbr.rel (0) target = $region97
  $region96: #{graph_c2r_forward.1} parent=0 // pred_region
    _
  $region97: #{graph_c2r_forward.1} parent=0 // pred_fallthru
    _
  // Predicated region
  $region98: #{graph_c2r_forward.1} parent=0 // pred_check
    _
  $region99: #{graph_c2r_forward.1} parent=0 // pred_check_branch
    %140 = sbr.rel (0) target = $region101
  $region100: #{graph_c2r_forward.1} parent=0 // pred_region
    _
  $region101: #{graph_c2r_forward.1} parent=0 // pred_fallthru
    _
  // Predicated region
  $region102: #{graph_c2r_forward.1} parent=0 // pred_check
    _
  $region103: #{graph_c2r_forward.1} parent=0 // pred_check_branch
    %142 = sbr.rel (0) target = $region105
  $region104: #{graph_c2r_forward.1} parent=0 // pred_region
    _
  $region105: #{graph_c2r_forward.1} parent=0 // pred_fallthru
    _
  // Predicated region
  $region106: #{graph_c2r_forward.1} parent=0 // pred_check
    _
  $region107: #{graph_c2r_forward.1} parent=0 // pred_check_branch
    %144 = sbr.rel (0) target = $region109
  $region108: #{graph_c2r_forward.1} parent=0 // pred_region
    _
  $region109: #{graph_c2r_forward.1} parent=0 // pred_fallthru
    _
  // Predicated region
  $region110: #{graph_c2r_forward.1} parent=0 // pred_check
    _
  $region111: #{graph_c2r_forward.1} parent=0 // pred_check_branch
    %146 = sbr.rel (0) target = $region113
  $region112: #{graph_c2r_forward.1} parent=0 // pred_region
    _
  $region113: #{graph_c2r_forward.1} parent=0 // pred_fallthru
    _
  // Predicated region
  $region114: #{graph_c2r_forward.1} parent=0 // pred_check
    _
  $region115: #{graph_c2r_forward.1} parent=0 // pred_check_branch
    %148 = sbr.rel (0) target = $region117
  $region116: #{graph_c2r_forward.1} parent=0 // pred_region
    _
  $region117: #{graph_c2r_forward.1} parent=0 // pred_fallthru
    _
  // Predicated region
  $region118: #{graph_c2r_forward.1} parent=0 // pred_check
    _
  $region119: #{graph_c2r_forward.1} parent=0 // pred_check_branch
    %150 = sbr.rel (0) target = $region121
  $region120: #{graph_c2r_forward.1} parent=0 // pred_region
    _
  $region121: #{graph_c2r_forward.1} parent=0 // pred_fallthru
    _
  // Predicated region
  $region122: #{graph_c2r_forward.1} parent=0 // pred_check
    _
  $region123: #{graph_c2r_forward.1} parent=0 // pred_check_branch
    %152 = sbr.rel (0) target = $region125
  $region124: #{graph_c2r_forward.1} parent=0 // pred_region
    _
  $region125: #{graph_c2r_forward.1} parent=0 // pred_fallthru
    _
  // Predicated region
  $region126: #{graph_c2r_forward.1} parent=0 // pred_check
    _
  $region127: #{graph_c2r_forward.1} parent=0 // pred_check_branch
    %154 = sbr.rel (0) target = $region129
  $region128: #{graph_c2r_forward.1} parent=0 // pred_region
    _
  $region129: #{graph_c2r_forward.1} parent=0 // pred_fallthru
    _
  // Predicated region
  $region130: #{graph_c2r_forward.1} parent=0 // pred_check
    _
  $region131: #{graph_c2r_forward.1} parent=0 // pred_check_branch
    %156 = sbr.rel (0) target = $region133
  $region132: #{graph_c2r_forward.1} parent=0 // pred_region
    _
  $region133: #{graph_c2r_forward.1} parent=0 // pred_fallthru
    _
  // Predicated region
  $region134: #{graph_c2r_forward.1} parent=0 // pred_check
    _
  $region135: #{graph_c2r_forward.1} parent=0 // pred_check_branch
    %158 = sbr.rel (0) target = $region137
  $region136: #{graph_c2r_forward.1} parent=0 // pred_region
    _
  $region137: #{graph_c2r_forward.1} parent=0 // pred_fallthru
    _
  // Predicated region
  $region138: #{graph_c2r_forward.1} parent=0 // pred_check
    _
  $region139: #{graph_c2r_forward.1} parent=0 // pred_check_branch
    %160 = sbr.rel (0) target = $region141
  $region140: #{graph_c2r_forward.1} parent=0 // pred_region
    _
  $region141: #{graph_c2r_forward.1} parent=0 // pred_fallthru
    _
  // Predicated region
  $region142: #{graph_c2r_forward.1} parent=0 // pred_check
    _
  $region143: #{graph_c2r_forward.1} parent=0 // pred_check_branch
    %162 = sbr.rel (0) target = $region145
  $region144: #{graph_c2r_forward.1} parent=0 // pred_region
    _
  $region145: #{graph_c2r_forward.1} parent=0 // pred_fallthru
    _
  // Predicated region
  $region146: #{graph_c2r_forward.1} parent=0 // pred_check
    _
  $region147: #{graph_c2r_forward.1} parent=0 // pred_check_branch
    %164 = sbr.rel (0) target = $region149
  $region148: #{graph_c2r_forward.1} parent=0 // pred_region
    _
  $region149: #{graph_c2r_forward.1} parent=0 // pred_fallthru
    _
  // Predicated region
  $region150: #{graph_c2r_forward.1} parent=0 // pred_check
    _
  $region151: #{graph_c2r_forward.1} parent=0 // pred_check_branch
    %166 = sbr.rel (0) target = $region153
  $region152: #{graph_c2r_forward.1} parent=0 // pred_region
    _
  $region153: #{graph_c2r_forward.1} parent=0 // pred_fallthru
    _
  // Predicated region
  $region154: #{graph_c2r_forward.1} parent=0 // pred_check
    _
  $region155: #{graph_c2r_forward.1} parent=0 // pred_check_branch
    %168 = sbr.rel (0) target = $region157
  $region156: #{graph_c2r_forward.1} parent=0 // pred_region
    _
  $region157: #{graph_c2r_forward.1} parent=0 // pred_fallthru
    _
  %v169 = vld [vmem:[%s1] sm:$0xff]
  %v170 = vld [vmem:[%s1 + $0x8] sm:$0xff]
  %v171 = vld [vmem:[%s1 + $0x10] sm:$0xff]
  %v172 = vld [vmem:[%s1 + $0x18] sm:$0xff]
  %v173 = vld [vmem:[%s3] sm:$0xff]
  %v174 = vld [vmem:[%s3 + $0x8] sm:$0xff]
  %v175 = vld [vmem:[%s3 + $0x10] sm:$0xff]
  %v176 = vld [vmem:[%s3 + $0x18] sm:$0xff]
  %vm177 = vcmask 261120
  %v179 = vsel %vm177, %v173, 0
  %v182 = vsel %vm177, %v174, 0
  %v185 = vsel %vm177, %v175, 0
  %v188 = vsel %vm177, %v176, 0
  %190 = vmatpush.msra.mxu0 0.0
  %191 = vmatpush.msra.mxu0 0.0
  %192 = vmatpush.msra.mxu0 0.0
  %193 = vmatpush.msra.mxu0 0.0
  %194 = vmatpush.msra.mxu0 0.0
  %195 = vmatpush.msra.mxu0 0.0
  %196 = vmatpush.msra.mxu0 0.0
  %197 = vmatpush.msra.mxu0 0.0
  %198 = vmatpush.msra.mxu0 0.0
  %199 = vmatpush.msra.mxu0 0.0
  %200 = vmatpush.msra.mxu0 0.0
  %201 = vmatpush.msra.mxu0 0.0
  %202 = vmatpush.msra.mxu0 %v172
  %203 = vmatpush.msra.mxu0 %v171
  %204 = vmatpush.msra.mxu0 %v170
  %205 = vmatpush.msra.mxu0 %v169
  %206 = vmatmul.f32.gmra.mxu0 %v179
  %v207 = vpop.f32.mrf.mxu0
  %v208 = vadd.f32 0.0, %v207
  %209 = vmatmul.f32.gmra.mxu0 %v182
  %v210 = vpop.f32.mrf.mxu0
  %v211 = vadd.f32 0.0, %v210
  %212 = vmatmul.f32.gmra.mxu0 %v185
  %v213 = vpop.f32.mrf.mxu0
  %v214 = vadd.f32 0.0, %v213
  %215 = vmatmul.f32.gmra.mxu0 %v188
  %v216 = vpop.f32.mrf.mxu0
  %v217 = vadd.f32 0.0, %v216
  %218 = vdwg.mxu0
  %v219 = vld [vmem:[%s21] sm:$0xff]
  %v220 = vld [vmem:[%s21 + $0x8] sm:$0xff]
  %v221 = vld [vmem:[%s21 + $0x10] sm:$0xff]
  %v222 = vld [vmem:[%s21 + $0x18] sm:$0xff]
  %v223 = vld [vmem:[%s23] sm:$0x1]
  %v225 = vperm.slane %v223, 0
  %v228 = vsel %vm177, %v208, 0
  %v231 = vsel %vm177, %v211, 0
  %v234 = vsel %vm177, %v214, 0
  %v237 = vsel %vm177, %v217, 0
  %239 = vmatpush.msra.mxu0 0.0
  %240 = vmatpush.msra.mxu0 0.0
  %241 = vmatpush.msra.mxu0 0.0
  %242 = vmatpush.msra.mxu0 0.0
  %243 = vmatpush.msra.mxu0 0.0
  %244 = vmatpush.msra.mxu0 0.0
  %245 = vmatpush.msra.mxu0 0.0
  %246 = vmatpush.msra.mxu0 0.0
  %247 = vmatpush.msra.mxu0 0.0
  %248 = vmatpush.msra.mxu0 0.0
  %249 = vmatpush.msra.mxu0 0.0
  %250 = vmatpush.msra.mxu0 0.0
  %251 = vmatpush.msra.mxu0 %v222
  %252 = vmatpush.msra.mxu0 %v221
  %253 = vmatpush.msra.mxu0 %v220
  %254 = vmatpush.msra.mxu0 %v219
  %255 = vmatmul.f32.gmra.mxu0 %v228
  %v256 = vpop.f32.mrf.mxu0
  %v257 = vadd.f32 %v225, %v256
  %258 = vmatmul.f32.gmra.mxu0 %v231
  %v259 = vpop.f32.mrf.mxu0
  %v260 = vadd.f32 %v225, %v259
  %261 = vmatmul.f32.gmra.mxu0 %v234
  %v262 = vpop.f32.mrf.mxu0
  %v263 = vadd.f32 %v225, %v262
  %264 = vmatmul.f32.gmra.mxu0 %v237
  %v265 = vpop.f32.mrf.mxu0
  %v266 = vadd.f32 %v225, %v265
  %267 = vdwg.mxu0
  %v268 = vmax.f32 %v257, 0.0
  %v269 = vmax.f32 %v260, 0.0
  %v270 = vmax.f32 %v263, 0.0
  %v271 = vmax.f32 %v266, 0.0
  %v272 = vadd.f32 %v268, %v169
  %v273 = vadd.f32 %v269, %v170
  %v274 = vadd.f32 %v270, %v171
  %v275 = vadd.f32 %v271, %v172
  %276 = vmatpush.msra.mxu0 0.0
  %277 = vmatpush.msra.mxu0 0.0
  %278 = vmatpush.msra.mxu0 0.0
  %279 = vmatpush.msra.mxu0 0.0
  %280 = vmatpush.msra.mxu0 0.0
  %281 = vmatpush.msra.mxu0 0.0
  %282 = vmatpush.msra.mxu0 0.0
  %283 = vmatpush.msra.mxu0 0.0
  %284 = vmatpush.msra.mxu0 0.0
  %285 = vmatpush.msra.mxu0 0.0
  %286 = vmatpush.msra.mxu0 0.0
  %287 = vmatpush.msra.mxu0 0.0
  %288 = vmatpush.msra.mxu0 %v275
  %289 = vmatpush.msra.mxu0 %v274
  %290 = vmatpush.msra.mxu0 %v273
  %291 = vmatpush.msra.mxu0 %v272
  %292 = vmatmul.f32.gmra.mxu0 %v179
  %v293 = vpop.f32.mrf.mxu0
  %v294 = vadd.f32 0.0, %v293
  %295 = vmatmul.f32.gmra.mxu0 %v182
  %v296 = vpop.f32.mrf.mxu0
  %v297 = vadd.f32 0.0, %v296
  %298 = vmatmul.f32.gmra.mxu0 %v185
  %v299 = vpop.f32.mrf.mxu0
  %v300 = vadd.f32 0.0, %v299
  %301 = vmatmul.f32.gmra.mxu0 %v188
  %v302 = vpop.f32.mrf.mxu0
  %v303 = vadd.f32 0.0, %v302
  %304 = vdwg.mxu0
  %s305 = scalar_lea.vmem %s21, 32
  %v306 = vld [vmem:[%s305] sm:$0xff]
  %v307 = vld [vmem:[%s305 + $0x8] sm:$0xff]
  %v308 = vld [vmem:[%s305 + $0x10] sm:$0xff]
  %v309 = vld [vmem:[%s305 + $0x18] sm:$0xff]
  %s310 = scalar_lea.vmem %s23, 1
  %v311 = vld [vmem:[%s310] sm:$0x1]
  %v313 = vperm.slane %v311, 0
  %v316 = vsel %vm177, %v294, 0
  %v319 = vsel %vm177, %v297, 0
  %v322 = vsel %vm177, %v300, 0
  %v325 = vsel %vm177, %v303, 0
  %327 = vmatpush.msra.mxu0 0.0
  %328 = vmatpush.msra.mxu0 0.0
  %329 = vmatpush.msra.mxu0 0.0
  %330 = vmatpush.msra.mxu0 0.0
  %331 = vmatpush.msra.mxu0 0.0
  %332 = vmatpush.msra.mxu0 0.0
  %333 = vmatpush.msra.mxu0 0.0
  %334 = vmatpush.msra.mxu0 0.0
  %335 = vmatpush.msra.mxu0 0.0
  %336 = vmatpush.msra.mxu0 0.0
  %337 = vmatpush.msra.mxu0 0.0
  %338 = vmatpush.msra.mxu0 0.0
  %339 = vmatpush.msra.mxu0 %v309
  %340 = vmatpush.msra.mxu0 %v308
  %341 = vmatpush.msra.mxu0 %v307
  %342 = vmatpush.msra.mxu0 %v306
  %343 = vmatmul.f32.gmra.mxu0 %v316
  %v344 = vpop.f32.mrf.mxu0
  %v345 = vadd.f32 %v313, %v344
  %346 = vmatmul.f32.gmra.mxu0 %v319
  %v347 = vpop.f32.mrf.mxu0
  %v348 = vadd.f32 %v313, %v347
  %349 = vmatmul.f32.gmra.mxu0 %v322
  %v350 = vpop.f32.mrf.mxu0
  %v351 = vadd.f32 %v313, %v350
  %352 = vmatmul.f32.gmra.mxu0 %v325
  %v353 = vpop.f32.mrf.mxu0
  %v354 = vadd.f32 %v313, %v353
  %355 = vdwg.mxu0
  %v356 = vmax.f32 %v345, 0.0
  %v357 = vmax.f32 %v348, 0.0
  %v358 = vmax.f32 %v351, 0.0
  %v359 = vmax.f32 %v354, 0.0
  %v360 = vadd.f32 %v356, %v272
  %v361 = vadd.f32 %v357, %v273
  %v362 = vadd.f32 %v358, %v274
  %v363 = vadd.f32 %v359, %v275
  %364 = vmatpush.msra.mxu0 0.0
  %365 = vmatpush.msra.mxu0 0.0
  %366 = vmatpush.msra.mxu0 0.0
  %367 = vmatpush.msra.mxu0 0.0
  %368 = vmatpush.msra.mxu0 0.0
  %369 = vmatpush.msra.mxu0 0.0
  %370 = vmatpush.msra.mxu0 0.0
  %371 = vmatpush.msra.mxu0 0.0
  %372 = vmatpush.msra.mxu0 0.0
  %373 = vmatpush.msra.mxu0 0.0
  %374 = vmatpush.msra.mxu0 0.0
  %375 = vmatpush.msra.mxu0 0.0
  %376 = vmatpush.msra.mxu0 %v363
  %377 = vmatpush.msra.mxu0 %v362
  %378 = vmatpush.msra.mxu0 %v361
  %379 = vmatpush.msra.mxu0 %v360
  %380 = vmatmul.f32.gmra.mxu0 %v179
  %v381 = vpop.f32.mrf.mxu0
  %v382 = vadd.f32 0.0, %v381
  %383 = vmatmul.f32.gmra.mxu0 %v182
  %v384 = vpop.f32.mrf.mxu0
  %v385 = vadd.f32 0.0, %v384
  %386 = vmatmul.f32.gmra.mxu0 %v185
  %v387 = vpop.f32.mrf.mxu0
  %v388 = vadd.f32 0.0, %v387
  %389 = vmatmul.f32.gmra.mxu0 %v188
  %v390 = vpop.f32.mrf.mxu0
  %v391 = vadd.f32 0.0, %v390
  %392 = vdwg.mxu0
  %s393 = scalar_lea.vmem %s21, 64
  %v394 = vld [vmem:[%s393] sm:$0xff]
  %v395 = vld [vmem:[%s393 + $0x8] sm:$0xff]
  %v396 = vld [vmem:[%s393 + $0x10] sm:$0xff]
  %v397 = vld [vmem:[%s393 + $0x18] sm:$0xff]
  %s398 = scalar_lea.vmem %s23, 2
  %v399 = vld [vmem:[%s398] sm:$0x1]
  %v401 = vperm.slane %v399, 0
  %v404 = vsel %vm177, %v382, 0
  %v407 = vsel %vm177, %v385, 0
  %v410 = vsel %vm177, %v388, 0
  %v413 = vsel %vm177, %v391, 0
  %415 = vmatpush.msra.mxu0 0.0
  %416 = vmatpush.msra.mxu0 0.0
  %417 = vmatpush.msra.mxu0 0.0
  %418 = vmatpush.msra.mxu0 0.0
  %419 = vmatpush.msra.mxu0 0.0
  %420 = vmatpush.msra.mxu0 0.0
  %421 = vmatpush.msra.mxu0 0.0
  %422 = vmatpush.msra.mxu0 0.0
  %423 = vmatpush.msra.mxu0 0.0
  %424 = vmatpush.msra.mxu0 0.0
  %425 = vmatpush.msra.mxu0 0.0
  %426 = vmatpush.msra.mxu0 0.0
  %427 = vmatpush.msra.mxu0 %v397
  %428 = vmatpush.msra.mxu0 %v396
  %429 = vmatpush.msra.mxu0 %v395
  %430 = vmatpush.msra.mxu0 %v394
  %431 = vmatmul.f32.gmra.mxu0 %v404
  %v432 = vpop.f32.mrf.mxu0
  %v433 = vadd.f32 %v401, %v432
  %434 = vmatmul.f32.gmra.mxu0 %v407
  %v435 = vpop.f32.mrf.mxu0
  %v436 = vadd.f32 %v401, %v435
  %437 = vmatmul.f32.gmra.mxu0 %v410
  %v438 = vpop.f32.mrf.mxu0
  %v439 = vadd.f32 %v401, %v438
  %440 = vmatmul.f32.gmra.mxu0 %v413
  %v441 = vpop.f32.mrf.mxu0
  %v442 = vadd.f32 %v401, %v441
  %443 = vdwg.mxu0
  %v444 = vmax.f32 %v433, 0.0
  %v445 = vmax.f32 %v436, 0.0
  %v446 = vmax.f32 %v439, 0.0
  %v447 = vmax.f32 %v442, 0.0
  %v448 = vadd.f32 %v444, %v360
  %v449 = vadd.f32 %v445, %v361
  %v450 = vadd.f32 %v446, %v362
  %v451 = vadd.f32 %v447, %v363
  %v452 = vld [vmem:[%s25] sm:$0xff]
  %v453 = vld [vmem:[%s25 + $0x8] sm:$0xff]
  %v454 = vld [vmem:[%s25 + $0x10] sm:$0xff]
  %v455 = vld [vmem:[%s25 + $0x18] sm:$0xff]
  %v456 = vld [vmem:[%s27] sm:$0x1]
  %v458 = vperm.slane %v456, 0
  %460 = vmatpush.msra.mxu0 0.0
  %461 = vmatpush.msra.mxu0 0.0
  %462 = vmatpush.msra.mxu0 0.0
  %463 = vmatpush.msra.mxu0 0.0
  %464 = vmatpush.msra.mxu0 0.0
  %465 = vmatpush.msra.mxu0 0.0
  %466 = vmatpush.msra.mxu0 0.0
  %467 = vmatpush.msra.mxu0 0.0
  %468 = vmatpush.msra.mxu0 0.0
  %469 = vmatpush.msra.mxu0 0.0
  %470 = vmatpush.msra.mxu0 0.0
  %471 = vmatpush.msra.mxu0 0.0
  %472 = vmatpush.msra.mxu0 %v455
  %473 = vmatpush.msra.mxu0 %v454
  %474 = vmatpush.msra.mxu0 %v453
  %475 = vmatpush.msra.mxu0 %v452
  %476 = vmatmul.f32.gmra.mxu0 %v228
  %v477 = vpop.f32.mrf.mxu0
  %v478 = vadd.f32 %v458, %v477
  %479 = vmatmul.f32.gmra.mxu0 %v231
  %v480 = vpop.f32.mrf.mxu0
  %v481 = vadd.f32 %v458, %v480
  %482 = vmatmul.f32.gmra.mxu0 %v234
  %v483 = vpop.f32.mrf.mxu0
  %v484 = vadd.f32 %v458, %v483
  %485 = vmatmul.f32.gmra.mxu0 %v237
  %v486 = vpop.f32.mrf.mxu0
  %v487 = vadd.f32 %v458, %v486
  %488 = vdwg.mxu0
  %v489 = vmax.f32 %v478, 0.0
  %v490 = vmax.f32 %v481, 0.0
  %v491 = vmax.f32 %v484, 0.0
  %v492 = vmax.f32 %v487, 0.0
  %v493 = vadd.f32 %v489, %v169
  %v494 = vadd.f32 %v490, %v170
  %v495 = vadd.f32 %v491, %v171
  %v496 = vadd.f32 %v492, %v172
  %497 = vmatpush.msra.mxu0 0.0
  %498 = vmatpush.msra.mxu0 0.0
  %499 = vmatpush.msra.mxu0 0.0
  %500 = vmatpush.msra.mxu0 0.0
  %501 = vmatpush.msra.mxu0 0.0
  %502 = vmatpush.msra.mxu0 0.0
  %503 = vmatpush.msra.mxu0 0.0
  %504 = vmatpush.msra.mxu0 0.0
  %505 = vmatpush.msra.mxu0 0.0
  %506 = vmatpush.msra.mxu0 0.0
  %507 = vmatpush.msra.mxu0 0.0
  %508 = vmatpush.msra.mxu0 0.0
  %509 = vmatpush.msra.mxu0 %v496
  %510 = vmatpush.msra.mxu0 %v495
  %511 = vmatpush.msra.mxu0 %v494
  %512 = vmatpush.msra.mxu0 %v493
  %513 = vmatmul.f32.gmra.mxu0 %v179
  %v514 = vpop.f32.mrf.mxu0
  %v515 = vadd.f32 0.0, %v514
  %516 = vmatmul.f32.gmra.mxu0 %v182
  %v517 = vpop.f32.mrf.mxu0
  %v518 = vadd.f32 0.0, %v517
  %519 = vmatmul.f32.gmra.mxu0 %v185
  %v520 = vpop.f32.mrf.mxu0
  %v521 = vadd.f32 0.0, %v520
  %522 = vmatmul.f32.gmra.mxu0 %v188
  %v523 = vpop.f32.mrf.mxu0
  %v524 = vadd.f32 0.0, %v523
  %525 = vdwg.mxu0
  %s526 = scalar_lea.vmem %s25, 32
  %v527 = vld [vmem:[%s526] sm:$0xff]
  %v528 = vld [vmem:[%s526 + $0x8] sm:$0xff]
  %v529 = vld [vmem:[%s526 + $0x10] sm:$0xff]
  %v530 = vld [vmem:[%s526 + $0x18] sm:$0xff]
  %s531 = scalar_lea.vmem %s27, 1
  %v532 = vld [vmem:[%s531] sm:$0x1]
  %v534 = vperm.slane %v532, 0
  %v537 = vsel %vm177, %v515, 0
  %v540 = vsel %vm177, %v518, 0
  %v543 = vsel %vm177, %v521, 0
  %v546 = vsel %vm177, %v524, 0
  %548 = vmatpush.msra.mxu0 0.0
  %549 = vmatpush.msra.mxu0 0.0
  %550 = vmatpush.msra.mxu0 0.0
  %551 = vmatpush.msra.mxu0 0.0
  %552 = vmatpush.msra.mxu0 0.0
  %553 = vmatpush.msra.mxu0 0.0
  %554 = vmatpush.msra.mxu0 0.0
  %555 = vmatpush.msra.mxu0 0.0
  %556 = vmatpush.msra.mxu0 0.0
  %557 = vmatpush.msra.mxu0 0.0
  %558 = vmatpush.msra.mxu0 0.0
  %559 = vmatpush.msra.mxu0 0.0
  %560 = vmatpush.msra.mxu0 %v530
  %561 = vmatpush.msra.mxu0 %v529
  %562 = vmatpush.msra.mxu0 %v528
  %563 = vmatpush.msra.mxu0 %v527
  %564 = vmatmul.f32.gmra.mxu0 %v537
  %v565 = vpop.f32.mrf.mxu0
  %v566 = vadd.f32 %v534, %v565
  %567 = vmatmul.f32.gmra.mxu0 %v540
  %v568 = vpop.f32.mrf.mxu0
  %v569 = vadd.f32 %v534, %v568
  %570 = vmatmul.f32.gmra.mxu0 %v543
  %v571 = vpop.f32.mrf.mxu0
  %v572 = vadd.f32 %v534, %v571
  %573 = vmatmul.f32.gmra.mxu0 %v546
  %v574 = vpop.f32.mrf.mxu0
  %v575 = vadd.f32 %v534, %v574
  %576 = vdwg.mxu0
  %v577 = vmax.f32 %v566, 0.0
  %v578 = vmax.f32 %v569, 0.0
  %v579 = vmax.f32 %v572, 0.0
  %v580 = vmax.f32 %v575, 0.0
  %v581 = vadd.f32 %v577, %v493
  %v582 = vadd.f32 %v578, %v494
  %v583 = vadd.f32 %v579, %v495
  %v584 = vadd.f32 %v580, %v496
  %v585 = vld [vmem:[%s5] sm:$0xf]
  %vm586 = vcmask 257024
  %v587 = vsel %vm586, %v585, 0.0
  %588 = vadd.xlane.f32.xlu0 %v587
  %v589 = vpop.xlane.xlu0 %588
  %v590 = vmax.f32 %v589, 1.0
  %v591 = vrcp.pop %v590
  %v592 = vmul.f32 %v590, %v591
  %v593 = vsub.f32 1.0, %v592
  %v594 = vmul.f32 %v591, %v593
  %v595 = vadd.f32 %v591, %v594
  %vm596 = vweird.f32 %v590
  %vm597 = vweird.f32 %v591
  %vm598 = vmor %vm596, %vm597
  %v599 = vsel %vm598, %v591, %v595
  %v600 = vand.u32 2147483647, %v590
  %vm601 = vcmp.eq.f32.partialorder %v600, 8.507059e+37
  %v602 = vand.u32 %v590, 2147483648
  %v603 = vor.u32 1.1754944e-38, %v602
  %v604 = vsel %vm601, %v603, %v599
  %v605 = vmul.f32 %v585, %v604
  %v607 = vsel %vm177, %v605, 0
  %609 = vmatpush.msra.mxu0 0.0
  %610 = vmatpush.msra.mxu0 0.0
  %611 = vmatpush.msra.mxu0 0.0
  %612 = vmatpush.msra.mxu0 0.0
  %613 = vmatpush.msra.mxu0 0.0
  %614 = vmatpush.msra.mxu0 0.0
  %615 = vmatpush.msra.mxu0 0.0
  %616 = vmatpush.msra.mxu0 0.0
  %617 = vmatpush.msra.mxu0 0.0
  %618 = vmatpush.msra.mxu0 0.0
  %619 = vmatpush.msra.mxu0 0.0
  %620 = vmatpush.msra.mxu0 0.0
  %621 = vmatpush.msra.mxu0 %v451
  %622 = vmatpush.msra.mxu0 %v450
  %623 = vmatpush.msra.mxu0 %v449
  %624 = vmatpush.msra.mxu0 %v448
  %625 = vmatmul.f32.gmra.mxu0 %v607
  %v626 = vpop.f32.mrf.mxu0
  %v627 = vadd.f32 0.0, %v626
  %628 = vdwg.mxu0
  %v629 = vld [vmem:[%s13] sm:$0xf]
  %v630 = vld [vmem:[%s11] sm:$0xf]
  %vm631 = vcmask 31744
  %v633 = vsel %vm631, %v630, 0
  %vm635 = vcmask 1043456
  %v637 = vsel %vm635, %v629, 0
  %639 = vmatpush.msra.mxu0 0.0
  %640 = vmatpush.msra.mxu0 0.0
  %641 = vmatpush.msra.mxu0 0.0
  %642 = vmatpush.msra.mxu0 0.0
  %643 = vmatpush.msra.mxu0 0.0
  %644 = vmatpush.msra.mxu0 0.0
  %645 = vmatpush.msra.mxu0 0.0
  %646 = vmatpush.msra.mxu0 0.0
  %647 = vmatpush.msra.mxu0 0.0
  %648 = vmatpush.msra.mxu0 0.0
  %649 = vmatpush.msra.mxu0 0.0
  %650 = vmatpush.msra.mxu0 0.0
  %651 = vmatpush.msra.mxu0 0.0
  %652 = vmatpush.msra.mxu0 0.0
  %653 = vmatpush.msra.mxu0 0.0
  %654 = vmatpush.msra.mxu0 %v637
  %655 = vmatmul.f32.gmra.mxu0 %v633
  %v656 = vpop.f32.mrf.mxu0
  %v657 = vadd.f32 0.0, %v656
  %658 = vdwg.mxu0
  %v659 = vld [vmem:[%s9] sm:$0xf]
  %v661 = vsel %vm631, %v659, 0
  %663 = vmatpush.msra.mxu0 0.0
  %664 = vmatpush.msra.mxu0 0.0
  %665 = vmatpush.msra.mxu0 0.0
  %666 = vmatpush.msra.mxu0 0.0
  %667 = vmatpush.msra.mxu0 0.0
  %668 = vmatpush.msra.mxu0 0.0
  %669 = vmatpush.msra.mxu0 0.0
  %670 = vmatpush.msra.mxu0 0.0
  %671 = vmatpush.msra.mxu0 0.0
  %672 = vmatpush.msra.mxu0 0.0
  %673 = vmatpush.msra.mxu0 0.0
  %674 = vmatpush.msra.mxu0 0.0
  %675 = vmatpush.msra.mxu0 0.0
  %676 = vmatpush.msra.mxu0 0.0
  %677 = vmatpush.msra.mxu0 0.0
  %678 = vmatpush.msra.mxu0 %v637
  %679 = vmatmul.f32.gmra.mxu0 %v661
  %v680 = vpop.f32.mrf.mxu0
  %v681 = vadd.f32 0.0, %v680
  %682 = vdwg.mxu0
  %v683 = vld [vmem:[%s53] sm:$0xff]
  %v684 = vld [vmem:[%s53 + $0x8] sm:$0xff]
  %v685 = vld [vmem:[%s53 + $0x10] sm:$0xff]
  %v686 = vld [vmem:[%s53 + $0x18] sm:$0xff]
  %v687 = vld [vmem:[%s55] sm:$0xff]
  %v688 = vld [vmem:[%s55 + $0x8] sm:$0xff]
  %v689 = vld [vmem:[%s55 + $0x10] sm:$0xff]
  %v690 = vld [vmem:[%s55 + $0x18] sm:$0xff]
  %v691 = vld [vmem:[%s57] sm:$0x1]
  %v693 = vsel %vm177, %v657, 0
  %695 = vmatpush.msra.mxu0 0.0
  %696 = vmatpush.msra.mxu0 0.0
  %697 = vmatpush.msra.mxu0 0.0
  %698 = vmatpush.msra.mxu0 0.0
  %699 = vmatpush.msra.mxu0 0.0
  %700 = vmatpush.msra.mxu0 0.0
  %701 = vmatpush.msra.mxu0 0.0
  %702 = vmatpush.msra.mxu0 0.0
  %703 = vmatpush.msra.mxu0 0.0
  %704 = vmatpush.msra.mxu0 0.0
  %705 = vmatpush.msra.mxu0 0.0
  %706 = vmatpush.msra.mxu0 0.0
  %707 = vmatpush.msra.mxu0 %v690
  %708 = vmatpush.msra.mxu0 %v689
  %709 = vmatpush.msra.mxu0 %v688
  %710 = vmatpush.msra.mxu0 %v687
  %711 = vmatmul.f32.gmra.mxu0 %v693
  %v712 = vpop.f32.mrf.mxu0
  %v713 = vadd.f32 0.0, %v712
  %714 = vdwg.mxu0
  %v716 = vsel %vm177, %v627, 0
  %718 = vmatpush.msra.mxu0 0.0
  %719 = vmatpush.msra.mxu0 0.0
  %720 = vmatpush.msra.mxu0 0.0
  %721 = vmatpush.msra.mxu0 0.0
  %722 = vmatpush.msra.mxu0 0.0
  %723 = vmatpush.msra.mxu0 0.0
  %724 = vmatpush.msra.mxu0 0.0
  %725 = vmatpush.msra.mxu0 0.0
  %726 = vmatpush.msra.mxu0 0.0
  %727 = vmatpush.msra.mxu0 0.0
  %728 = vmatpush.msra.mxu0 0.0
  %729 = vmatpush.msra.mxu0 0.0
  %730 = vmatpush.msra.mxu0 %v686
  %731 = vmatpush.msra.mxu0 %v685
  %732 = vmatpush.msra.mxu0 %v684
  %733 = vmatpush.msra.mxu0 %v683
  %734 = vmatmul.f32.gmra.mxu0 %v716
  %v735 = vpop.f32.mrf.mxu0
  %v736 = vadd.f32 %v713, %v735
  %737 = vdwg.mxu0
  %v739 = vperm.slane %v691, 0
  %v741 = vadd.f32 %v736, %v739
  %v743 = vsel %vm177, %v681, 0
  %745 = vmatpush.msra.mxu0 0.0
  %746 = vmatpush.msra.mxu0 0.0
  %747 = vmatpush.msra.mxu0 0.0
  %748 = vmatpush.msra.mxu0 0.0
  %749 = vmatpush.msra.mxu0 0.0
  %750 = vmatpush.msra.mxu0 0.0
  %751 = vmatpush.msra.mxu0 0.0
  %752 = vmatpush.msra.mxu0 0.0
  %753 = vmatpush.msra.mxu0 0.0
  %754 = vmatpush.msra.mxu0 0.0
  %755 = vmatpush.msra.mxu0 0.0
  %756 = vmatpush.msra.mxu0 0.0
  %757 = vmatpush.msra.mxu0 %v690
  %758 = vmatpush.msra.mxu0 %v689
  %759 = vmatpush.msra.mxu0 %v688
  %760 = vmatpush.msra.mxu0 %v687
  %761 = vmatmul.f32.gmra.mxu0 %v743
  %v762 = vpop.f32.mrf.mxu0
  %v763 = vadd.f32 0.0, %v762
  %764 = vdwg.mxu0
  %v766 = vsel %vm177, %v741, 0
  %768 = vmatpush.msra.mxu0 0.0
  %769 = vmatpush.msra.mxu0 0.0
  %770 = vmatpush.msra.mxu0 0.0
  %771 = vmatpush.msra.mxu0 0.0
  %772 = vmatpush.msra.mxu0 0.0
  %773 = vmatpush.msra.mxu0 0.0
  %774 = vmatpush.msra.mxu0 0.0
  %775 = vmatpush.msra.mxu0 0.0
  %776 = vmatpush.msra.mxu0 0.0
  %777 = vmatpush.msra.mxu0 0.0
  %778 = vmatpush.msra.mxu0 0.0
  %779 = vmatpush.msra.mxu0 0.0
  %780 = vmatpush.msra.mxu0 %v686
  %781 = vmatpush.msra.mxu0 %v685
  %782 = vmatpush.msra.mxu0 %v684
  %783 = vmatpush.msra.mxu0 %v683
  %784 = vmatmul.f32.gmra.mxu0 %v766
  %v785 = vpop.f32.mrf.mxu0
  %v786 = vadd.f32 %v763, %v785
  %787 = vdwg.mxu0
  %v788 = vadd.f32 %v786, %v739
  %v789 = vld [vmem:[%s29] sm:$0xff]
  %v790 = vld [vmem:[%s29 + $0x8] sm:$0xff]
  %v791 = vld [vmem:[%s29 + $0x10] sm:$0xff]
  %v792 = vld [vmem:[%s29 + $0x18] sm:$0xff]
  %v793 = vld [vmem:[%s31] sm:$0x1]
  %v794 = vld [vmem:[%s33] sm:$0x1]
  %v795 = vld [vmem:[%s35] sm:$0x1]
  %v796 = vld [vmem:[%s37] sm:$0xff]
  %v797 = vld [vmem:[%s37 + $0x8] sm:$0xff]
  %v798 = vld [vmem:[%s37 + $0x10] sm:$0xff]
  %v799 = vld [vmem:[%s37 + $0x18] sm:$0xff]
  %v800 = vld [vmem:[%s37 + $0x20] sm:$0xff]
  %v801 = vld [vmem:[%s37 + $0x28] sm:$0xff]
  %v802 = vld [vmem:[%s37 + $0x30] sm:$0xff]
  %v803 = vld [vmem:[%s37 + $0x38] sm:$0xff]
  %v804 = vld [vmem:[%s39] sm:$0x1]
  %v806 = vperm.slane %v793, 0
  %v809 = vsel %vm177, %v581, 0
  %v812 = vsel %vm177, %v582, 0
  %v815 = vsel %vm177, %v583, 0
  %v818 = vsel %vm177, %v584, 0
  %820 = vmatpush.msra.mxu0 0.0
  %821 = vmatpush.msra.mxu0 0.0
  %822 = vmatpush.msra.mxu0 0.0
  %823 = vmatpush.msra.mxu0 0.0
  %824 = vmatpush.msra.mxu0 0.0
  %825 = vmatpush.msra.mxu0 0.0
  %826 = vmatpush.msra.mxu0 0.0
  %827 = vmatpush.msra.mxu0 0.0
  %828 = vmatpush.msra.mxu0 0.0
  %829 = vmatpush.msra.mxu0 0.0
  %830 = vmatpush.msra.mxu0 0.0
  %831 = vmatpush.msra.mxu0 0.0
  %832 = vmatpush.msra.mxu0 %v792
  %833 = vmatpush.msra.mxu0 %v791
  %834 = vmatpush.msra.mxu0 %v790
  %835 = vmatpush.msra.mxu0 %v789
  %836 = vmatmul.f32.gmra.mxu0 %v809
  %v837 = vpop.f32.mrf.mxu0
  %v838 = vadd.f32 %v806, %v837
  %839 = vmatmul.f32.gmra.mxu0 %v812
  %v840 = vpop.f32.mrf.mxu0
  %v841 = vadd.f32 %v806, %v840
  %842 = vmatmul.f32.gmra.mxu0 %v815
  %v843 = vpop.f32.mrf.mxu0
  %v844 = vadd.f32 %v806, %v843
  %845 = vmatmul.f32.gmra.mxu0 %v818
  %v846 = vpop.f32.mrf.mxu0
  %v847 = vadd.f32 %v806, %v846
  %848 = vdwg.mxu0
  %v850 = vperm.slane %v794, 0
  %v852 = vmul.f32 %v838, %v850
  %v853 = vmul.f32 %v841, %v850
  %v854 = vmul.f32 %v844, %v850
  %v855 = vmul.f32 %v847, %v850
  %v857 = vperm.slane %v795, 0
  %v859 = vadd.f32 %v852, %v857
  %v860 = vadd.f32 %v853, %v857
  %v861 = vadd.f32 %v854, %v857
  %v862 = vadd.f32 %v855, %v857
  %v863 = vmax.f32 %v859, 0.0
  %v864 = vmax.f32 %v860, 0.0
  %v865 = vmax.f32 %v861, 0.0
  %v866 = vmax.f32 %v862, 0.0
  %v868 = vperm.slane %v804, 0
  %vm870 = vcmask 523264
  %v872 = vsel %vm870, %v863, 0
  %v875 = vsel %vm870, %v864, 0
  %v878 = vsel %vm870, %v865, 0
  %v881 = vsel %vm870, %v866, 0
  %883 = vmatpush.msra.mxu0 0.0
  %884 = vmatpush.msra.mxu0 0.0
  %885 = vmatpush.msra.mxu0 0.0
  %886 = vmatpush.msra.mxu0 0.0
  %887 = vmatpush.msra.mxu0 0.0
  %888 = vmatpush.msra.mxu0 0.0
  %889 = vmatpush.msra.mxu0 0.0
  %890 = vmatpush.msra.mxu0 0.0
  %891 = vmatpush.msra.mxu0 %v803
  %892 = vmatpush.msra.mxu0 %v802
  %893 = vmatpush.msra.mxu0 %v801
  %894 = vmatpush.msra.mxu0 %v800
  %895 = vmatpush.msra.mxu0 %v799
  %896 = vmatpush.msra.mxu0 %v798
  %897 = vmatpush.msra.mxu0 %v797
  %898 = vmatpush.msra.mxu0 %v796
  %899 = vmatmul.f32.gmra.mxu0 %v872
  %v900 = vpop.f32.mrf.mxu0
  %v901 = vadd.f32 %v868, %v900
  %902 = vmatmul.f32.gmra.mxu0 %v875
  %v903 = vpop.f32.mrf.mxu0
  %v904 = vadd.f32 %v868, %v903
  %905 = vmatmul.f32.gmra.mxu0 %v878
  %v906 = vpop.f32.mrf.mxu0
  %v907 = vadd.f32 %v868, %v906
  %908 = vmatmul.f32.gmra.mxu0 %v881
  %v909 = vpop.f32.mrf.mxu0
  %v910 = vadd.f32 %v868, %v909
  %911 = vdwg.mxu0
  %v912 = vld [vmem:[%s7] sm:$0xff]
  %v913 = vld [vmem:[%s7 + $0x8] sm:$0xff]
  %v914 = vld [vmem:[%s7 + $0x10] sm:$0xff]
  %v915 = vld [vmem:[%s7 + $0x18] sm:$0xff]
  %v916 = vadd.f32 %v901, %v912
  %v917 = vadd.f32 %v904, %v913
  %v918 = vadd.f32 %v907, %v914
  %v919 = vadd.f32 %v910, %v915
  %vm920 = vcmask 15360
  %v921 = vsel %vm920, %v916, -inf
  %922 = vmax.xlane.f32.xlu0 %v921
  %v923 = vpop.xlane.xlu0 %922
  %v924 = vsel %vm920, %v917, -inf
  %925 = vmax.xlane.f32.xlu0 %v924
  %v926 = vpop.xlane.xlu0 %925
  %v927 = vsel %vm920, %v918, -inf
  %928 = vmax.xlane.f32.xlu0 %v927
  %v929 = vpop.xlane.xlu0 %928
  %v930 = vsel %vm920, %v919, -inf
  %931 = vmax.xlane.f32.xlu0 %v930
  %v932 = vpop.xlane.xlu0 %931
  %v933 = vsub.f32 %v916, %v923
  %v934 = vsub.f32 %v917, %v926
  %v935 = vsub.f32 %v918, %v929
  %v936 = vsub.f32 %v919, %v932
  %v937 = vmul.f32 %v933, 1.442695
  %v938 = vpow.pop %v937
  %v939 = vmul.f32 %v934, 1.442695
  %v940 = vpow.pop %v939
  %v941 = vmul.f32 %v935, 1.442695
  %v942 = vpow.pop %v941
  %v943 = vmul.f32 %v936, 1.442695
  %v944 = vpow.pop %v943
  %v945 = vsel %vm920, %v938, 0.0
  %946 = vadd.xlane.f32.xlu0 %v945
  %v947 = vpop.xlane.xlu0 %946
  %v948 = vsel %vm920, %v940, 0.0
  %949 = vadd.xlane.f32.xlu0 %v948
  %v950 = vpop.xlane.xlu0 %949
  %v951 = vsel %vm920, %v942, 0.0
  %952 = vadd.xlane.f32.xlu0 %v951
  %v953 = vpop.xlane.xlu0 %952
  %v954 = vsel %vm920, %v944, 0.0
  %955 = vadd.xlane.f32.xlu0 %v954
  %v956 = vpop.xlane.xlu0 %955
  %v957 = vrcp.pop %v947
  %v958 = vmul.f32 %v947, %v957
  %v959 = vsub.f32 1.0, %v958
  %v960 = vmul.f32 %v957, %v959
  %v961 = vadd.f32 %v957, %v960
  %vm962 = vweird.f32 %v947
  %vm963 = vweird.f32 %v957
  %vm964 = vmor %vm962, %vm963
  %v965 = vsel %vm964, %v957, %v961
  %v966 = vand.u32 2147483647, %v947
  %vm967 = vcmp.eq.f32.partialorder %v966, 8.507059e+37
  %v968 = vand.u32 %v947, 2147483648
  %v969 = vor.u32 1.1754944e-38, %v968
  %v970 = vsel %vm967, %v969, %v965
  %v971 = vmul.f32 %v938, %v970
  %v972 = vrcp.pop %v950
  %v973 = vmul.f32 %v950, %v972
  %v974 = vsub.f32 1.0, %v973
  %v975 = vmul.f32 %v972, %v974
  %v976 = vadd.f32 %v972, %v975
  %vm977 = vweird.f32 %v950
  %vm978 = vweird.f32 %v972
  %vm979 = vmor %vm977, %vm978
  %v980 = vsel %vm979, %v972, %v976
  %v981 = vand.u32 2147483647, %v950
  %vm982 = vcmp.eq.f32.partialorder %v981, 8.507059e+37
  %v983 = vand.u32 %v950, 2147483648
  %v984 = vor.u32 1.1754944e-38, %v983
  %v985 = vsel %vm982, %v984, %v980
  %v986 = vmul.f32 %v940, %v985
  %v987 = vrcp.pop %v953
  %v988 = vmul.f32 %v953, %v987
  %v989 = vsub.f32 1.0, %v988
  %v990 = vmul.f32 %v987, %v989
  %v991 = vadd.f32 %v987, %v990
  %vm992 = vweird.f32 %v953
  %vm993 = vweird.f32 %v987
  %vm994 = vmor %vm992, %vm993
  %v995 = vsel %vm994, %v987, %v991
  %v996 = vand.u32 2147483647, %v953
  %vm997 = vcmp.eq.f32.partialorder %v996, 8.507059e+37
  %v998 = vand.u32 %v953, 2147483648
  %v999 = vor.u32 1.1754944e-38, %v998
  %v1000 = vsel %vm997, %v999, %v995
  %v1001 = vmul.f32 %v942, %v1000
  %v1002 = vrcp.pop %v956
  %v1003 = vmul.f32 %v956, %v1002
  %v1004 = vsub.f32 1.0, %v1003
  %v1005 = vmul.f32 %v1002, %v1004
  %v1006 = vadd.f32 %v1002, %v1005
  %vm1007 = vweird.f32 %v956
  %vm1008 = vweird.f32 %v1002
  %vm1009 = vmor %vm1007, %vm1008
  %v1010 = vsel %vm1009, %v1002, %v1006
  %v1011 = vand.u32 2147483647, %v956
  %vm1012 = vcmp.eq.f32.partialorder %v1011, 8.507059e+37
  %v1013 = vand.u32 %v956, 2147483648
  %v1014 = vor.u32 1.1754944e-38, %v1013
  %v1015 = vsel %vm1012, %v1014, %v1010
  %v1016 = vmul.f32 %v944, %v1015
  %1018 = vset.pattern.permute.xlu0 1
  %1019 = vperm.xlu0 %1018, %v971
  %v1020 = vpop.permute.xlu0 %1019
  %1023 = vset.pattern.permute.xlu0 1
  %1024 = vperm.xlu0 %1023, %v986
  %v1025 = vpop.permute.xlu0 %1024
  %1028 = vset.pattern.permute.xlu0 1
  %1029 = vperm.xlu0 %1028, %v1001
  %v1030 = vpop.permute.xlu0 %1029
  %1033 = vset.pattern.permute.xlu0 1
  %1034 = vperm.xlu0 %1033, %v1016
  %v1035 = vpop.permute.xlu0 %1034
  %v1037 = vmul.f32 %v1020, %v448
  %v1038 = vmul.f32 %v1025, %v449
  %v1039 = vmul.f32 %v1030, %v450
  %v1040 = vmul.f32 %v1035, %v451
  %1041 = vmatpush.msra.mxu0 0.0
  %1042 = vmatpush.msra.mxu0 0.0
  %1043 = vmatpush.msra.mxu0 0.0
  %1044 = vmatpush.msra.mxu0 0.0
  %1045 = vmatpush.msra.mxu0 0.0
  %1046 = vmatpush.msra.mxu0 0.0
  %1047 = vmatpush.msra.mxu0 0.0
  %1048 = vmatpush.msra.mxu0 0.0
  %1049 = vmatpush.msra.mxu0 0.0
  %1050 = vmatpush.msra.mxu0 0.0
  %1051 = vmatpush.msra.mxu0 0.0
  %1052 = vmatpush.msra.mxu0 0.0
  %1053 = vmatpush.msra.mxu0 %v1040
  %1054 = vmatpush.msra.mxu0 %v1039
  %1055 = vmatpush.msra.mxu0 %v1038
  %1056 = vmatpush.msra.mxu0 %v1037
  %1057 = vmatmul.f32.gmra.mxu0 %v607
  %v1058 = vpop.f32.mrf.mxu0
  %v1059 = vadd.f32 0.0, %v1058
  %1060 = vdwg.mxu0
  %1061 = vrot.lane.b32.xlu0 %v971, 127
  %v1062 = vpop.permute.xlu0 %1061
  %1063 = vrot.lane.b32.xlu0 %v986, 127
  %v1064 = vpop.permute.xlu0 %1063
  %1065 = vrot.lane.b32.xlu0 %v1001, 127
  %v1066 = vpop.permute.xlu0 %1065
  %1067 = vrot.lane.b32.xlu0 %v1016, 127
  %v1068 = vpop.permute.xlu0 %1067
  %v1074 = vsel %vm177, %v585, 0
  %1076 = vmatpush.msra.mxu0 0.0
  %1077 = vmatpush.msra.mxu0 0.0
  %1078 = vmatpush.msra.mxu0 0.0
  %1079 = vmatpush.msra.mxu0 0.0
  %1080 = vmatpush.msra.mxu0 0.0
  %1081 = vmatpush.msra.mxu0 0.0
  %1082 = vmatpush.msra.mxu0 0.0
  %1083 = vmatpush.msra.mxu0 0.0
  %1084 = vmatpush.msra.mxu0 0.0
  %1085 = vmatpush.msra.mxu0 0.0
  %1086 = vmatpush.msra.mxu0 0.0
  %1087 = vmatpush.msra.mxu0 0.0
  %1088 = vmatpush.msra.mxu0 %v1068
  %1089 = vmatpush.msra.mxu0 %v1066
  %1090 = vmatpush.msra.mxu0 %v1064
  %1091 = vmatpush.msra.mxu0 %v1062
  %1092 = vmatmul.f32.gmra.mxu0 %v1074
  %v1093 = vpop.f32.mrf.mxu0
  %v1094 = vadd.f32 0.0, %v1093
  %1095 = vdwg.mxu0
  %v1096 = vadd.f32 %v1094, 1e-08
  %v1097 = vsub.f32 %v589, %v1094
  %v1098 = vadd.f32 %v1097, 1e-08
  %v1099 = vadd.f32 %v1096, %v1098
  %v1100 = vrcp.pop %v1099
  %v1101 = vmul.f32 %v1099, %v1100
  %v1102 = vsub.f32 1.0, %v1101
  %v1103 = vmul.f32 %v1100, %v1102
  %v1104 = vadd.f32 %v1100, %v1103
  %vm1105 = vweird.f32 %v1099
  %vm1106 = vweird.f32 %v1100
  %vm1107 = vmor %vm1105, %vm1106
  %v1108 = vsel %vm1107, %v1100, %v1104
  %v1109 = vand.u32 2147483647, %v1099
  %vm1110 = vcmp.eq.f32.partialorder %v1109, 8.507059e+37
  %v1111 = vand.u32 %v1099, 2147483648
  %v1112 = vor.u32 1.1754944e-38, %v1111
  %v1113 = vsel %vm1110, %v1112, %v1108
  %v1114 = vmul.f32 %v1096, %v1113
  %v1115 = vsub.f32 %v1114, 0.4
  %v1116 = vand.u32 2147483647, %v1115
  %vm1117 = vcmask 3072
  %v1118 = vsel %vm1117, %v1116, 0.0
  %v1119 = vrot.slane %v1118, 4
  %v1120 = vadd.f32 %v1118, %v1119
  %v1121 = vrot.slane %v1120, 2
  %v1122 = vadd.f32 %v1120, %v1121
  %v1123 = vrot.slane %v1122, 1
  %v1124 = vadd.f32 %v1122, %v1123
  %v1125 = vrcp.pop 4.0
  %v1126 = vmul.f32 4.0, %v1125
  %v1127 = vsub.f32 1.0, %v1126
  %v1128 = vmul.f32 %v1125, %v1127
  %v1129 = vadd.f32 %v1125, %v1128
  %vm1130 = vweird.f32 %v1125
  %v1131 = vsel %vm1130, %v1125, %v1129
  %v1132 = vmul.f32 %v1124, %v1131
  %v1133 = vlaneseq
  %v1134 = vshrl.u32 %v1133, 7
  %v1135 = vadd.s32 %v1134, 8
  %v1136 = vlaneseq
  %v1137 = vand.u32 %v1136, 127
  %vm1138 = vcmp.eq.s32.totalorder %v1134, %v1137
  %vm1139 = vcmp.eq.s32.totalorder %v1135, %v1137
  %v1140 = vsel %vm1138, 1, 0
  %v1141 = vsel %vm1139, 1, 0
  %v1142 = vcvt.s32.f32 %v1140
  %v1143 = vcvt.s32.f32 %v1141
  %v1144 = vadd.s32 %v1137, 4
  %vm1145 = vcmp.eq.s32.totalorder %v1134, %v1144
  %vm1146 = vcmp.eq.s32.totalorder %v1135, %v1144
  %v1147 = vsel %vm1145, 1, 0
  %v1148 = vsel %vm1146, 1, 0
  %v1149 = vcvt.s32.f32 %v1147
  %v1150 = vcvt.s32.f32 %v1148
  %v1151 = vadd.s32 %v1137, 8
  %vm1152 = vcmp.eq.s32.totalorder %v1134, %v1151
  %vm1153 = vcmp.eq.s32.totalorder %v1135, %v1151
  %v1154 = vsel %vm1152, 1, 0
  %v1155 = vsel %vm1153, 1, 0
  %v1156 = vcvt.s32.f32 %v1154
  %v1157 = vcvt.s32.f32 %v1155
  %v1159 = vsel %vm631, %v1149, 0
  %v1162 = vsel %vm631, %v1150, 0
  %v1164 = vsel %vm635, %v741, 0
  %1166 = vmatpush.msra.mxu0 0.0
  %1167 = vmatpush.msra.mxu0 0.0
  %1168 = vmatpush.msra.mxu0 0.0
  %1169 = vmatpush.msra.mxu0 0.0
  %1170 = vmatpush.msra.mxu0 0.0
  %1171 = vmatpush.msra.mxu0 0.0
  %1172 = vmatpush.msra.mxu0 0.0
  %1173 = vmatpush.msra.mxu0 0.0
  %1174 = vmatpush.msra.mxu0 0.0
  %1175 = vmatpush.msra.mxu0 0.0
  %1176 = vmatpush.msra.mxu0 0.0
  %1177 = vmatpush.msra.mxu0 0.0
  %1178 = vmatpush.msra.mxu0 0.0
  %1179 = vmatpush.msra.mxu0 0.0
  %1180 = vmatpush.msra.mxu0 0.0
  %1181 = vmatpush.msra.mxu0 %v1164
  %1182 = vmatmul.f32.gmra.mxu0 %v1159
  %v1183 = vpop.f32.mrf.mxu0
  %v1184 = vadd.f32 0.0, %v1183
  %1185 = vmatmul.f32.gmra.mxu0 %v1162
  %v1186 = vpop.f32.mrf.mxu0
  %v1187 = vadd.f32 0.0, %v1186
  %1188 = vdwg.mxu0
  %v1190 = vsel %vm631, %v1142, 0
  %v1193 = vsel %vm631, %v1143, 0
  %v1195 = vsel %vm635, %v627, 0
  %1197 = vmatpush.msra.mxu0 0.0
  %1198 = vmatpush.msra.mxu0 0.0
  %1199 = vmatpush.msra.mxu0 0.0
  %1200 = vmatpush.msra.mxu0 0.0
  %1201 = vmatpush.msra.mxu0 0.0
  %1202 = vmatpush.msra.mxu0 0.0
  %1203 = vmatpush.msra.mxu0 0.0
  %1204 = vmatpush.msra.mxu0 0.0
  %1205 = vmatpush.msra.mxu0 0.0
  %1206 = vmatpush.msra.mxu0 0.0
  %1207 = vmatpush.msra.mxu0 0.0
  %1208 = vmatpush.msra.mxu0 0.0
  %1209 = vmatpush.msra.mxu0 0.0
  %1210 = vmatpush.msra.mxu0 0.0
  %1211 = vmatpush.msra.mxu0 0.0
  %1212 = vmatpush.msra.mxu0 %v1195
  %1213 = vmatmul.f32.gmra.mxu0 %v1190
  %v1214 = vpop.f32.mrf.mxu0
  %v1215 = vadd.f32 %v1184, %v1214
  %1216 = vmatmul.f32.gmra.mxu0 %v1193
  %v1217 = vpop.f32.mrf.mxu0
  %v1218 = vadd.f32 %v1187, %v1217
  %1219 = vdwg.mxu0
  %v1221 = vsel %vm631, %v1156, 0
  %v1224 = vsel %vm631, %v1157, 0
  %v1227 = vsel %vm635, %v1059, 0
  %1229 = vmatpush.msra.mxu0 0.0
  %1230 = vmatpush.msra.mxu0 0.0
  %1231 = vmatpush.msra.mxu0 0.0
  %1232 = vmatpush.msra.mxu0 0.0
  %1233 = vmatpush.msra.mxu0 0.0
  %1234 = vmatpush.msra.mxu0 0.0
  %1235 = vmatpush.msra.mxu0 0.0
  %1236 = vmatpush.msra.mxu0 0.0
  %1237 = vmatpush.msra.mxu0 0.0
  %1238 = vmatpush.msra.mxu0 0.0
  %1239 = vmatpush.msra.mxu0 0.0
  %1240 = vmatpush.msra.mxu0 0.0
  %1241 = vmatpush.msra.mxu0 0.0
  %1242 = vmatpush.msra.mxu0 0.0
  %1243 = vmatpush.msra.mxu0 0.0
  %1244 = vmatpush.msra.mxu0 %v1227
  %1245 = vmatmul.f32.gmra.mxu0 %v1221
  %v1246 = vpop.f32.mrf.mxu0
  %v1247 = vadd.f32 0.0, %v1246
  %1248 = vmatmul.f32.gmra.mxu0 %v1224
  %v1249 = vpop.f32.mrf.mxu0
  %v1250 = vadd.f32 0.0, %v1249
  %1251 = vdwg.mxu0
  %v1252 = vadd.f32 %v1215, %v1247
  %v1253 = vadd.f32 %v1218, %v1250
  %v1254 = vld [vmem:[%s41] sm:$0xff]
  %v1255 = vld [vmem:[%s41 + $0x8] sm:$0xff]
  %v1256 = vld [vmem:[%s41 + $0x10] sm:$0xff]
  %v1257 = vld [vmem:[%s41 + $0x18] sm:$0xff]
  %v1258 = vld [vmem:[%s43] sm:$0x1]
  %v1259 = vld [vmem:[%s45] sm:$0x1]
  %v1260 = vld [vmem:[%s47] sm:$0x1]
  %v1261 = vld [vmem:[%s49] sm:$0xff]
  %v1262 = vld [vmem:[%s49 + $0x8] sm:$0xff]
  %v1263 = vld [vmem:[%s49 + $0x10] sm:$0xff]
  %v1264 = vld [vmem:[%s49 + $0x18] sm:$0xff]
  %v1265 = vld [vmem:[%s49 + $0x20] sm:$0xff]
  %v1266 = vld [vmem:[%s49 + $0x28] sm:$0xff]
  %v1267 = vld [vmem:[%s49 + $0x30] sm:$0xff]
  %v1268 = vld [vmem:[%s49 + $0x38] sm:$0xff]
  %v1269 = vld [vmem:[%s51] sm:$0x1]
  %v1271 = vperm.slane %v1258, 0
  %v1274 = vsel %vm177, %v1252, 0
  %v1277 = vsel %vm177, %v1253, 0
  %1279 = vmatpush.msra.mxu0 0.0
  %1280 = vmatpush.msra.mxu0 0.0
  %1281 = vmatpush.msra.mxu0 0.0
  %1282 = vmatpush.msra.mxu0 0.0
  %1283 = vmatpush.msra.mxu0 0.0
  %1284 = vmatpush.msra.mxu0 0.0
  %1285 = vmatpush.msra.mxu0 0.0
  %1286 = vmatpush.msra.mxu0 0.0
  %1287 = vmatpush.msra.mxu0 0.0
  %1288 = vmatpush.msra.mxu0 0.0
  %1289 = vmatpush.msra.mxu0 0.0
  %1290 = vmatpush.msra.mxu0 0.0
  %1291 = vmatpush.msra.mxu0 %v1257
  %1292 = vmatpush.msra.mxu0 %v1256
  %1293 = vmatpush.msra.mxu0 %v1255
  %1294 = vmatpush.msra.mxu0 %v1254
  %1295 = vmatmul.f32.gmra.mxu0 %v1274
  %v1296 = vpop.f32.mrf.mxu0
  %v1297 = vadd.f32 %v1271, %v1296
  %1298 = vmatmul.f32.gmra.mxu0 %v1277
  %v1299 = vpop.f32.mrf.mxu0
  %v1300 = vadd.f32 %v1271, %v1299
  %1301 = vdwg.mxu0
  %v1303 = vperm.slane %v1259, 0
  %v1305 = vmul.f32 %v1297, %v1303
  %v1306 = vmul.f32 %v1300, %v1303
  %v1308 = vperm.slane %v1260, 0
  %v1310 = vadd.f32 %v1305, %v1308
  %v1311 = vadd.f32 %v1306, %v1308
  %v1312 = vmax.f32 %v1310, 0.0
  %v1313 = vmax.f32 %v1311, 0.0
  %v1315 = vperm.slane %v1269, 0
  %v1318 = vsel %vm870, %v1312, 0
  %v1321 = vsel %vm870, %v1313, 0
  %1323 = vmatpush.msra.mxu0 0.0
  %1324 = vmatpush.msra.mxu0 0.0
  %1325 = vmatpush.msra.mxu0 0.0
  %1326 = vmatpush.msra.mxu0 0.0
  %1327 = vmatpush.msra.mxu0 0.0
  %1328 = vmatpush.msra.mxu0 0.0
  %1329 = vmatpush.msra.mxu0 0.0
  %1330 = vmatpush.msra.mxu0 0.0
  %1331 = vmatpush.msra.mxu0 %v1268
  %1332 = vmatpush.msra.mxu0 %v1267
  %1333 = vmatpush.msra.mxu0 %v1266
  %1334 = vmatpush.msra.mxu0 %v1265
  %1335 = vmatpush.msra.mxu0 %v1264
  %1336 = vmatpush.msra.mxu0 %v1263
  %1337 = vmatpush.msra.mxu0 %v1262
  %1338 = vmatpush.msra.mxu0 %v1261
  %1339 = vmatmul.f32.gmra.mxu0 %v1318
  %v1340 = vpop.f32.mrf.mxu0
  %v1341 = vadd.f32 %v1315, %v1340
  %1342 = vmatmul.f32.gmra.mxu0 %v1321
  %v1343 = vpop.f32.mrf.mxu0
  %v1344 = vadd.f32 %v1315, %v1343
  %1345 = vdwg.mxu0
  %1346 = vst [vmem:[%s79] sm:$0xff] %v1341
  %1347 = vst [vmem:[%s79 + $0x8] sm:$0xf] %v1344
  %v1348 = vld [vmem:[%s15] sm:$0xff]
  %v1349 = vld [vmem:[%s15 + $0x8] sm:$0xff]
  %v1350 = vld [vmem:[%s17] sm:$0xff]
  %v1351 = vld [vmem:[%s17 + $0x8] sm:$0xff]
  %v1352 = vld [vmem:[%s19] sm:$0xf]
  %v1353 = vld [vmem:[%s59] sm:$0xff]
  %v1354 = vld [vmem:[%s59 + $0x8] sm:$0xff]
  %v1355 = vld [vmem:[%s59 + $0x10] sm:$0xff]
  %v1356 = vld [vmem:[%s59 + $0x18] sm:$0xff]
  %v1357 = vld [vmem:[%s61] sm:$0xff]
  %v1358 = vld [vmem:[%s61 + $0x8] sm:$0xff]
  %v1359 = vld [vmem:[%s61 + $0x10] sm:$0xff]
  %v1360 = vld [vmem:[%s61 + $0x18] sm:$0xff]
  %v1361 = vld [vmem:[%s63] sm:$0x1]
  %v1362 = vld [vmem:[%s65] sm:$0xff]
  %v1363 = vld [vmem:[%s65 + $0x8] sm:$0xff]
  %v1364 = vld [vmem:[%s65 + $0x10] sm:$0xff]
  %v1365 = vld [vmem:[%s65 + $0x18] sm:$0xff]
  %v1366 = vld [vmem:[#allocation2] sm:$0x1]
  %1367 = vmatpush.msra.mxu0 0.0
  %1368 = vmatpush.msra.mxu0 0.0
  %1369 = vmatpush.msra.mxu0 0.0
  %1370 = vmatpush.msra.mxu0 0.0
  %1371 = vmatpush.msra.mxu0 0.0
  %1372 = vmatpush.msra.mxu0 0.0
  %1373 = vmatpush.msra.mxu0 0.0
  %1374 = vmatpush.msra.mxu0 0.0
  %1375 = vmatpush.msra.mxu0 0.0
  %1376 = vmatpush.msra.mxu0 0.0
  %1377 = vmatpush.msra.mxu0 0.0
  %1378 = vmatpush.msra.mxu0 0.0
  %1379 = vmatpush.msra.mxu0 %v1356
  %1380 = vmatpush.msra.mxu0 %v1355
  %1381 = vmatpush.msra.mxu0 %v1354
  %1382 = vmatpush.msra.mxu0 %v1353
  %1383 = vmatmul.f32.gmra.mxu0 %v716
  %v1384 = vpop.f32.mrf.mxu0
  %v1385 = vadd.f32 0.0, %v1384
  %1386 = vdwg.mxu0
  %v1388 = vsel %vm177, %v788, 0
  %1390 = vmatpush.msra.mxu0 0.0
  %1391 = vmatpush.msra.mxu0 0.0
  %1392 = vmatpush.msra.mxu0 0.0
  %1393 = vmatpush.msra.mxu0 0.0
  %1394 = vmatpush.msra.mxu0 0.0
  %1395 = vmatpush.msra.mxu0 0.0
  %1396 = vmatpush.msra.mxu0 0.0
  %1397 = vmatpush.msra.mxu0 0.0
  %1398 = vmatpush.msra.mxu0 0.0
  %1399 = vmatpush.msra.mxu0 0.0
  %1400 = vmatpush.msra.mxu0 0.0
  %1401 = vmatpush.msra.mxu0 0.0
  %1402 = vmatpush.msra.mxu0 %v1360
  %1403 = vmatpush.msra.mxu0 %v1359
  %1404 = vmatpush.msra.mxu0 %v1358
  %1405 = vmatpush.msra.mxu0 %v1357
  %1406 = vmatmul.f32.gmra.mxu0 %v1388
  %v1407 = vpop.f32.mrf.mxu0
  %v1408 = vadd.f32 0.0, %v1407
  %1409 = vdwg.mxu0
  %v1410 = vadd.f32 %v1385, %v1408
  %v1412 = vperm.slane %v1361, 0
  %v1414 = vadd.f32 %v1410, %v1412
  %v1415 = vmax.f32 %v1414, 0.0
  %v1417 = vperm.slane %v1366, 0
  %v1420 = vsel %vm177, %v1415, 0
  %1422 = vmatpush.msra.mxu0 0.0
  %1423 = vmatpush.msra.mxu0 0.0
  %1424 = vmatpush.msra.mxu0 0.0
  %1425 = vmatpush.msra.mxu0 0.0
  %1426 = vmatpush.msra.mxu0 0.0
  %1427 = vmatpush.msra.mxu0 0.0
  %1428 = vmatpush.msra.mxu0 0.0
  %1429 = vmatpush.msra.mxu0 0.0
  %1430 = vmatpush.msra.mxu0 0.0
  %1431 = vmatpush.msra.mxu0 0.0
  %1432 = vmatpush.msra.mxu0 0.0
  %1433 = vmatpush.msra.mxu0 0.0
  %1434 = vmatpush.msra.mxu0 %v1365
  %1435 = vmatpush.msra.mxu0 %v1364
  %1436 = vmatpush.msra.mxu0 %v1363
  %1437 = vmatpush.msra.mxu0 %v1362
  %1438 = vmatmul.f32.gmra.mxu0 %v1420
  %v1439 = vpop.f32.mrf.mxu0
  %v1440 = vadd.f32 %v1417, %v1439
  %1441 = vdwg.mxu0
  %vm1442 = vcmp.gt.f32.partialorder %v1440, 20.0
  %v1443 = vmin.f32 %v1440, 20.0
  %v1444 = vmul.f32 %v1443, 1.442695
  %v1445 = vpow.pop %v1444
  %v1446 = vadd.f32 %v1445, 1.0
  %v1447 = vlog2.pop %v1446
  %v1448 = vmul.f32 %v1447, 0.6931472
  %v1449 = vmul.f32 -0.5, %v1445
  %v1450 = vadd.f32 %v1449, 1.0
  %v1451 = vmul.f32 %v1450, %v1445
  %v1452 = vand.u32 2147483647, %v1445
  %vm1453 = vcmp.lt.f32.partialorder %v1452, 0.0004427343
  %v1454 = vsel %vm1453, %v1451, %v1448
  %v1455 = vsel %vm1442, %v1440, %v1454
  %v1457 = vsel %vm631, %v1350, 0
  %v1460 = vsel %vm631, %v1351, 0
  %v1463 = vsel %vm635, %v1408, 0
  %1465 = vmatpush.msra.mxu0 0.0
  %1466 = vmatpush.msra.mxu0 0.0
  %1467 = vmatpush.msra.mxu0 0.0
  %1468 = vmatpush.msra.mxu0 0.0
  %1469 = vmatpush.msra.mxu0 0.0
  %1470 = vmatpush.msra.mxu0 0.0
  %1471 = vmatpush.msra.mxu0 0.0
  %1472 = vmatpush.msra.mxu0 0.0
  %1473 = vmatpush.msra.mxu0 0.0
  %1474 = vmatpush.msra.mxu0 0.0
  %1475 = vmatpush.msra.mxu0 0.0
  %1476 = vmatpush.msra.mxu0 0.0
  %1477 = vmatpush.msra.mxu0 0.0
  %1478 = vmatpush.msra.mxu0 0.0
  %1479 = vmatpush.msra.mxu0 0.0
  %1480 = vmatpush.msra.mxu0 %v1463
  %1481 = vmatmul.f32.gmra.mxu0 %v1457
  %v1482 = vpop.f32.mrf.mxu0
  %v1483 = vadd.f32 0.0, %v1482
  %1484 = vmatmul.f32.gmra.mxu0 %v1460
  %v1485 = vpop.f32.mrf.mxu0
  %v1486 = vadd.f32 0.0, %v1485
  %1487 = vdwg.mxu0
  %v1489 = vsel %vm631, %v1348, 0
  %v1492 = vsel %vm631, %v1349, 0
  %v1495 = vsel %vm635, %v1385, 0
  %1497 = vmatpush.msra.mxu0 0.0
  %1498 = vmatpush.msra.mxu0 0.0
  %1499 = vmatpush.msra.mxu0 0.0
  %1500 = vmatpush.msra.mxu0 0.0
  %1501 = vmatpush.msra.mxu0 0.0
  %1502 = vmatpush.msra.mxu0 0.0
  %1503 = vmatpush.msra.mxu0 0.0
  %1504 = vmatpush.msra.mxu0 0.0
  %1505 = vmatpush.msra.mxu0 0.0
  %1506 = vmatpush.msra.mxu0 0.0
  %1507 = vmatpush.msra.mxu0 0.0
  %1508 = vmatpush.msra.mxu0 0.0
  %1509 = vmatpush.msra.mxu0 0.0
  %1510 = vmatpush.msra.mxu0 0.0
  %1511 = vmatpush.msra.mxu0 0.0
  %1512 = vmatpush.msra.mxu0 %v1495
  %1513 = vmatmul.f32.gmra.mxu0 %v1489
  %v1514 = vpop.f32.mrf.mxu0
  %v1515 = vadd.f32 %v1483, %v1514
  %1516 = vmatmul.f32.gmra.mxu0 %v1492
  %v1517 = vpop.f32.mrf.mxu0
  %v1518 = vadd.f32 %v1486, %v1517
  %1519 = vdwg.mxu0
  %v1520 = vadd.f32 %v1515, %v1412
  %v1521 = vadd.f32 %v1518, %v1412
  %v1522 = vmax.f32 %v1520, 0.0
  %v1523 = vmax.f32 %v1521, 0.0
  %v1525 = vsel %vm177, %v1522, 0
  %v1528 = vsel %vm177, %v1523, 0
  %1530 = vmatpush.msra.mxu0 0.0
  %1531 = vmatpush.msra.mxu0 0.0
  %1532 = vmatpush.msra.mxu0 0.0
  %1533 = vmatpush.msra.mxu0 0.0
  %1534 = vmatpush.msra.mxu0 0.0
  %1535 = vmatpush.msra.mxu0 0.0
  %1536 = vmatpush.msra.mxu0 0.0
  %1537 = vmatpush.msra.mxu0 0.0
  %1538 = vmatpush.msra.mxu0 0.0
  %1539 = vmatpush.msra.mxu0 0.0
  %1540 = vmatpush.msra.mxu0 0.0
  %1541 = vmatpush.msra.mxu0 0.0
  %1542 = vmatpush.msra.mxu0 %v1365
  %1543 = vmatpush.msra.mxu0 %v1364
  %1544 = vmatpush.msra.mxu0 %v1363
  %1545 = vmatpush.msra.mxu0 %v1362
  %1546 = vmatmul.f32.gmra.mxu0 %v1525
  %v1547 = vpop.f32.mrf.mxu0
  %v1548 = vadd.f32 %v1417, %v1547
  %1549 = vmatmul.f32.gmra.mxu0 %v1528
  %v1550 = vpop.f32.mrf.mxu0
  %v1551 = vadd.f32 %v1417, %v1550
  %1552 = vdwg.mxu0
  %vm1553 = vcmp.gt.f32.partialorder %v1548, 20.0
  %vm1554 = vcmp.gt.f32.partialorder %v1551, 20.0
  %v1555 = vmin.f32 %v1548, 20.0
  %v1556 = vmin.f32 %v1551, 20.0
  %v1557 = vmul.f32 %v1555, 1.442695
  %v1558 = vpow.pop %v1557
  %v1559 = vmul.f32 %v1556, 1.442695
  %v1560 = vpow.pop %v1559
  %v1561 = vadd.f32 %v1558, 1.0
  %v1562 = vlog2.pop %v1561
  %v1563 = vmul.f32 %v1562, 0.6931472
  %v1564 = vmul.f32 -0.5, %v1558
  %v1565 = vadd.f32 %v1564, 1.0
  %v1566 = vmul.f32 %v1565, %v1558
  %v1567 = vand.u32 2147483647, %v1558
  %vm1568 = vcmp.lt.f32.partialorder %v1567, 0.0004427343
  %v1569 = vsel %vm1568, %v1566, %v1563
  %v1570 = vadd.f32 %v1560, 1.0
  %v1571 = vlog2.pop %v1570
  %v1572 = vmul.f32 %v1571, 0.6931472
  %v1573 = vmul.f32 -0.5, %v1560
  %v1574 = vadd.f32 %v1573, 1.0
  %v1575 = vmul.f32 %v1574, %v1560
  %v1576 = vand.u32 2147483647, %v1560
  %vm1577 = vcmp.lt.f32.partialorder %v1576, 0.0004427343
  %v1578 = vsel %vm1577, %v1575, %v1572
  %v1579 = vsel %vm1553, %v1548, %v1569
  %v1580 = vsel %vm1554, %v1551, %v1578
  %vm1581 = vcmask 7168
  %v1582 = vsel %vm1581, %v1579, -inf
  %v1583 = vsel %vm1581, %v1580, -inf
  %v1584 = vmax.f32 %v1582, %v1583
  %v1585 = vrot.slane %v1584, 4
  %v1586 = vmax.f32 %v1584, %v1585
  %v1587 = vrot.slane %v1586, 2
  %v1588 = vmax.f32 %v1586, %v1587
  %v1589 = vrot.slane %v1588, 1
  %v1590 = vmax.f32 %v1588, %v1589
  %v1591 = vsub.f32 %v1579, %v1590
  %v1592 = vsub.f32 %v1580, %v1590
  %v1593 = vmul.f32 %v1591, 1.442695
  %v1594 = vpow.pop %v1593
  %v1595 = vmul.f32 %v1592, 1.442695
  %v1596 = vpow.pop %v1595
  %vm1597 = vcmask 130048
  %v1599 = vsel %vm1597, %v1352, 0
  %1601 = vmatpush.msra.mxu0 0.0
  %1602 = vmatpush.msra.mxu0 0.0
  %1603 = vmatpush.msra.mxu0 0.0
  %1604 = vmatpush.msra.mxu0 0.0
  %1605 = vmatpush.msra.mxu0 0.0
  %1606 = vmatpush.msra.mxu0 0.0
  %1607 = vmatpush.msra.mxu0 0.0
  %1608 = vmatpush.msra.mxu0 0.0
  %1609 = vmatpush.msra.mxu0 0.0
  %1610 = vmatpush.msra.mxu0 0.0
  %1611 = vmatpush.msra.mxu0 0.0
  %1612 = vmatpush.msra.mxu0 0.0
  %1613 = vmatpush.msra.mxu0 0.0
  %1614 = vmatpush.msra.mxu0 0.0
  %1615 = vmatpush.msra.mxu0 %v1596
  %1616 = vmatpush.msra.mxu0 %v1594
  %1617 = vmatmul.f32.gmra.mxu0 %v1599
  %v1618 = vpop.f32.mrf.mxu0
  %v1619 = vadd.f32 0.0, %v1618
  %1620 = vdwg.mxu0
  %v1621 = vmax.f32 %v1619, 1e-30
  %v1622 = vlog2.pop %v1621
  %v1623 = vmul.f32 %v1622, 0.6931472
  %v1624 = vadd.f32 %v1623, %v1590
  %v1625 = vsel %vm1117, %v1455, 0.0
  %v1626 = vrot.slane %v1625, 4
  %v1627 = vadd.f32 %v1625, %v1626
  %v1628 = vrot.slane %v1627, 2
  %v1629 = vadd.f32 %v1627, %v1628
  %v1630 = vrot.slane %v1629, 1
  %v1631 = vadd.f32 %v1629, %v1630
  %v1632 = vmul.f32 %v1631, %v1131
  %v1633 = vsel %vm1117, %v1624, 0.0
  %v1634 = vrot.slane %v1633, 4
  %v1635 = vadd.f32 %v1633, %v1634
  %v1636 = vrot.slane %v1635, 2
  %v1637 = vadd.f32 %v1635, %v1636
  %v1638 = vrot.slane %v1637, 1
  %v1639 = vadd.f32 %v1637, %v1638
  %v1640 = vmul.f32 %v1639, %v1131
  %v1641 = vsub.f32 %v1640, 1.3862944
  %v1642 = vsub.f32 %v1632, %v1641
  %v1643 = vsub.f32 0.0, %v1642
  %v1644 = vld [vmem:[%s69] sm:$0xff]
  %v1645 = vld [vmem:[%s69 + $0x8] sm:$0xff]
  %v1646 = vld [vmem:[%s69 + $0x10] sm:$0xff]
  %v1647 = vld [vmem:[%s69 + $0x18] sm:$0xff]
  %v1648 = vld [vmem:[%s71] sm:$0xff]
  %v1649 = vld [vmem:[%s71 + $0x8] sm:$0xff]
  %v1650 = vld [vmem:[%s71 + $0x10] sm:$0xff]
  %v1651 = vld [vmem:[%s71 + $0x18] sm:$0xff]
  %v1652 = vld [vmem:[%s73] sm:$0x1]
  %v1653 = vld [vmem:[%s75] sm:$0xff]
  %v1654 = vld [vmem:[%s75 + $0x8] sm:$0xff]
  %v1655 = vld [vmem:[%s75 + $0x10] sm:$0xff]
  %v1656 = vld [vmem:[%s75 + $0x18] sm:$0xff]
  %v1657 = vld [vmem:[#allocation3] sm:$0x1]
  %1658 = vmatpush.msra.mxu0 0.0
  %1659 = vmatpush.msra.mxu0 0.0
  %1660 = vmatpush.msra.mxu0 0.0
  %1661 = vmatpush.msra.mxu0 0.0
  %1662 = vmatpush.msra.mxu0 0.0
  %1663 = vmatpush.msra.mxu0 0.0
  %1664 = vmatpush.msra.mxu0 0.0
  %1665 = vmatpush.msra.mxu0 0.0
  %1666 = vmatpush.msra.mxu0 0.0
  %1667 = vmatpush.msra.mxu0 0.0
  %1668 = vmatpush.msra.mxu0 0.0
  %1669 = vmatpush.msra.mxu0 0.0
  %1670 = vmatpush.msra.mxu0 %v1647
  %1671 = vmatpush.msra.mxu0 %v1646
  %1672 = vmatpush.msra.mxu0 %v1645
  %1673 = vmatpush.msra.mxu0 %v1644
  %1674 = vmatmul.f32.gmra.mxu0 %v716
  %v1675 = vpop.f32.mrf.mxu0
  %v1676 = vadd.f32 0.0, %v1675
  %1677 = vdwg.mxu0
  %v1678 = vsel %vm177, %v1059, 0
  %1680 = vmatpush.msra.mxu0 0.0
  %1681 = vmatpush.msra.mxu0 0.0
  %1682 = vmatpush.msra.mxu0 0.0
  %1683 = vmatpush.msra.mxu0 0.0
  %1684 = vmatpush.msra.mxu0 0.0
  %1685 = vmatpush.msra.mxu0 0.0
  %1686 = vmatpush.msra.mxu0 0.0
  %1687 = vmatpush.msra.mxu0 0.0
  %1688 = vmatpush.msra.mxu0 0.0
  %1689 = vmatpush.msra.mxu0 0.0
  %1690 = vmatpush.msra.mxu0 0.0
  %1691 = vmatpush.msra.mxu0 0.0
  %1692 = vmatpush.msra.mxu0 %v1651
  %1693 = vmatpush.msra.mxu0 %v1650
  %1694 = vmatpush.msra.mxu0 %v1649
  %1695 = vmatpush.msra.mxu0 %v1648
  %1696 = vmatmul.f32.gmra.mxu0 %v1678
  %v1697 = vpop.f32.mrf.mxu0
  %v1698 = vadd.f32 0.0, %v1697
  %1699 = vdwg.mxu0
  %v1700 = vadd.f32 %v1676, %v1698
  %v1702 = vperm.slane %v1652, 0
  %v1704 = vadd.f32 %v1700, %v1702
  %v1705 = vmax.f32 %v1704, 0.0
  %v1707 = vperm.slane %v1657, 0
  %v1710 = vsel %vm177, %v1705, 0
  %1712 = vmatpush.msra.mxu0 0.0
  %1713 = vmatpush.msra.mxu0 0.0
  %1714 = vmatpush.msra.mxu0 0.0
  %1715 = vmatpush.msra.mxu0 0.0
  %1716 = vmatpush.msra.mxu0 0.0
  %1717 = vmatpush.msra.mxu0 0.0
  %1718 = vmatpush.msra.mxu0 0.0
  %1719 = vmatpush.msra.mxu0 0.0
  %1720 = vmatpush.msra.mxu0 0.0
  %1721 = vmatpush.msra.mxu0 0.0
  %1722 = vmatpush.msra.mxu0 0.0
  %1723 = vmatpush.msra.mxu0 0.0
  %1724 = vmatpush.msra.mxu0 %v1656
  %1725 = vmatpush.msra.mxu0 %v1655
  %1726 = vmatpush.msra.mxu0 %v1654
  %1727 = vmatpush.msra.mxu0 %v1653
  %1728 = vmatmul.f32.gmra.mxu0 %v1710
  %v1729 = vpop.f32.mrf.mxu0
  %v1730 = vadd.f32 %v1707, %v1729
  %1731 = vdwg.mxu0
  %vm1732 = vcmp.gt.f32.partialorder %v1730, 20.0
  %v1733 = vmin.f32 %v1730, 20.0
  %v1734 = vmul.f32 %v1733, 1.442695
  %v1735 = vpow.pop %v1734
  %v1736 = vadd.f32 %v1735, 1.0
  %v1737 = vlog2.pop %v1736
  %v1738 = vmul.f32 %v1737, 0.6931472
  %v1739 = vmul.f32 -0.5, %v1735
  %v1740 = vadd.f32 %v1739, 1.0
  %v1741 = vmul.f32 %v1740, %v1735
  %v1742 = vand.u32 2147483647, %v1735
  %vm1743 = vcmp.lt.f32.partialorder %v1742, 0.0004427343
  %v1744 = vsel %vm1743, %v1741, %v1738
  %v1745 = vsel %vm1732, %v1730, %v1744
  %v1747 = vsel %vm635, %v1698, 0
  %1749 = vmatpush.msra.mxu0 0.0
  %1750 = vmatpush.msra.mxu0 0.0
  %1751 = vmatpush.msra.mxu0 0.0
  %1752 = vmatpush.msra.mxu0 0.0
  %1753 = vmatpush.msra.mxu0 0.0
  %1754 = vmatpush.msra.mxu0 0.0
  %1755 = vmatpush.msra.mxu0 0.0
  %1756 = vmatpush.msra.mxu0 0.0
  %1757 = vmatpush.msra.mxu0 0.0
  %1758 = vmatpush.msra.mxu0 0.0
  %1759 = vmatpush.msra.mxu0 0.0
  %1760 = vmatpush.msra.mxu0 0.0
  %1761 = vmatpush.msra.mxu0 0.0
  %1762 = vmatpush.msra.mxu0 0.0
  %1763 = vmatpush.msra.mxu0 0.0
  %1764 = vmatpush.msra.mxu0 %v1747
  %1765 = vmatmul.f32.gmra.mxu0 %v1457
  %v1766 = vpop.f32.mrf.mxu0
  %v1767 = vadd.f32 0.0, %v1766
  %1768 = vmatmul.f32.gmra.mxu0 %v1460
  %v1769 = vpop.f32.mrf.mxu0
  %v1770 = vadd.f32 0.0, %v1769
  %1771 = vdwg.mxu0
  %v1773 = vsel %vm635, %v1676, 0
  %1775 = vmatpush.msra.mxu0 0.0
  %1776 = vmatpush.msra.mxu0 0.0
  %1777 = vmatpush.msra.mxu0 0.0
  %1778 = vmatpush.msra.mxu0 0.0
  %1779 = vmatpush.msra.mxu0 0.0
  %1780 = vmatpush.msra.mxu0 0.0
  %1781 = vmatpush.msra.mxu0 0.0
  %1782 = vmatpush.msra.mxu0 0.0
  %1783 = vmatpush.msra.mxu0 0.0
  %1784 = vmatpush.msra.mxu0 0.0
  %1785 = vmatpush.msra.mxu0 0.0
  %1786 = vmatpush.msra.mxu0 0.0
  %1787 = vmatpush.msra.mxu0 0.0
  %1788 = vmatpush.msra.mxu0 0.0
  %1789 = vmatpush.msra.mxu0 0.0
  %1790 = vmatpush.msra.mxu0 %v1773
  %1791 = vmatmul.f32.gmra.mxu0 %v1489
  %v1792 = vpop.f32.mrf.mxu0
  %v1793 = vadd.f32 %v1767, %v1792
  %1794 = vmatmul.f32.gmra.mxu0 %v1492
  %v1795 = vpop.f32.mrf.mxu0
  %v1796 = vadd.f32 %v1770, %v1795
  %1797 = vdwg.mxu0
  %v1798 = vadd.f32 %v1793, %v1702
  %v1799 = vadd.f32 %v1796, %v1702
  %v1800 = vmax.f32 %v1798, 0.0
  %v1801 = vmax.f32 %v1799, 0.0
  %v1803 = vsel %vm177, %v1800, 0
  %v1806 = vsel %vm177, %v1801, 0
  %1808 = vmatpush.msra.mxu0 0.0
  %1809 = vmatpush.msra.mxu0 0.0
  %1810 = vmatpush.msra.mxu0 0.0
  %1811 = vmatpush.msra.mxu0 0.0
  %1812 = vmatpush.msra.mxu0 0.0
  %1813 = vmatpush.msra.mxu0 0.0
  %1814 = vmatpush.msra.mxu0 0.0
  %1815 = vmatpush.msra.mxu0 0.0
  %1816 = vmatpush.msra.mxu0 0.0
  %1817 = vmatpush.msra.mxu0 0.0
  %1818 = vmatpush.msra.mxu0 0.0
  %1819 = vmatpush.msra.mxu0 0.0
  %1820 = vmatpush.msra.mxu0 %v1656
  %1821 = vmatpush.msra.mxu0 %v1655
  %1822 = vmatpush.msra.mxu0 %v1654
  %1823 = vmatpush.msra.mxu0 %v1653
  %1824 = vmatmul.f32.gmra.mxu0 %v1803
  %v1825 = vpop.f32.mrf.mxu0
  %v1826 = vadd.f32 %v1707, %v1825
  %1827 = vmatmul.f32.gmra.mxu0 %v1806
  %v1828 = vpop.f32.mrf.mxu0
  %v1829 = vadd.f32 %v1707, %v1828
  %1830 = vdwg.mxu0
  %vm1831 = vcmp.gt.f32.partialorder %v1826, 20.0
  %vm1832 = vcmp.gt.f32.partialorder %v1829, 20.0
  %v1833 = vmin.f32 %v1826, 20.0
  %v1834 = vmin.f32 %v1829, 20.0
  %v1835 = vmul.f32 %v1833, 1.442695
  %v1836 = vpow.pop %v1835
  %v1837 = vmul.f32 %v1834, 1.442695
  %v1838 = vpow.pop %v1837
  %v1839 = vadd.f32 %v1836, 1.0
  %v1840 = vlog2.pop %v1839
  %v1841 = vmul.f32 %v1840, 0.6931472
  %v1842 = vmul.f32 -0.5, %v1836
  %v1843 = vadd.f32 %v1842, 1.0
  %v1844 = vmul.f32 %v1843, %v1836
  %v1845 = vand.u32 2147483647, %v1836
  %vm1846 = vcmp.lt.f32.partialorder %v1845, 0.0004427343
  %v1847 = vsel %vm1846, %v1844, %v1841
  %v1848 = vadd.f32 %v1838, 1.0
  %v1849 = vlog2.pop %v1848
  %v1850 = vmul.f32 %v1849, 0.6931472
  %v1851 = vmul.f32 -0.5, %v1838
  %v1852 = vadd.f32 %v1851, 1.0
  %v1853 = vmul.f32 %v1852, %v1838
  %v1854 = vand.u32 2147483647, %v1838
  %vm1855 = vcmp.lt.f32.partialorder %v1854, 0.0004427343
  %v1856 = vsel %vm1855, %v1853, %v1850
  %v1857 = vsel %vm1831, %v1826, %v1847
  %v1858 = vsel %vm1832, %v1829, %v1856
  %v1859 = vsel %vm1581, %v1857, -inf
  %v1860 = vsel %vm1581, %v1858, -inf
  %v1861 = vmax.f32 %v1859, %v1860
  %v1862 = vrot.slane %v1861, 4
  %v1863 = vmax.f32 %v1861, %v1862
  %v1864 = vrot.slane %v1863, 2
  %v1865 = vmax.f32 %v1863, %v1864
  %v1866 = vrot.slane %v1865, 1
  %v1867 = vmax.f32 %v1865, %v1866
  %v1868 = vsub.f32 %v1857, %v1867
  %v1869 = vsub.f32 %v1858, %v1867
  %v1870 = vmul.f32 %v1868, 1.442695
  %v1871 = vpow.pop %v1870
  %v1872 = vmul.f32 %v1869, 1.442695
  %v1873 = vpow.pop %v1872
  %1874 = vmatpush.msra.mxu0 0.0
  %1875 = vmatpush.msra.mxu0 0.0
  %1876 = vmatpush.msra.mxu0 0.0
  %1877 = vmatpush.msra.mxu0 0.0
  %1878 = vmatpush.msra.mxu0 0.0
  %1879 = vmatpush.msra.mxu0 0.0
  %1880 = vmatpush.msra.mxu0 0.0
  %1881 = vmatpush.msra.mxu0 0.0
  %1882 = vmatpush.msra.mxu0 0.0
  %1883 = vmatpush.msra.mxu0 0.0
  %1884 = vmatpush.msra.mxu0 0.0
  %1885 = vmatpush.msra.mxu0 0.0
  %1886 = vmatpush.msra.mxu0 0.0
  %1887 = vmatpush.msra.mxu0 0.0
  %1888 = vmatpush.msra.mxu0 %v1873
  %1889 = vmatpush.msra.mxu0 %v1871
  %1890 = vmatmul.f32.gmra.mxu0 %v1599
  %v1891 = vpop.f32.mrf.mxu0
  %v1892 = vadd.f32 0.0, %v1891
  %1893 = vdwg.mxu0
  %v1894 = vmax.f32 %v1892, 1e-30
  %v1895 = vlog2.pop %v1894
  %v1896 = vmul.f32 %v1895, 0.6931472
  %v1897 = vadd.f32 %v1896, %v1867
  %v1898 = vsel %vm1117, %v1745, 0.0
  %v1899 = vrot.slane %v1898, 4
  %v1900 = vadd.f32 %v1898, %v1899
  %v1901 = vrot.slane %v1900, 2
  %v1902 = vadd.f32 %v1900, %v1901
  %v1903 = vrot.slane %v1902, 1
  %v1904 = vadd.f32 %v1902, %v1903
  %v1905 = vmul.f32 %v1904, %v1131
  %v1906 = vsel %vm1117, %v1897, 0.0
  %v1907 = vrot.slane %v1906, 4
  %v1908 = vadd.f32 %v1906, %v1907
  %v1909 = vrot.slane %v1908, 2
  %v1910 = vadd.f32 %v1908, %v1909
  %v1911 = vrot.slane %v1910, 1
  %v1912 = vadd.f32 %v1910, %v1911
  %v1913 = vmul.f32 %v1912, %v1131
  %v1914 = vsub.f32 %v1913, 1.3862944
  %v1915 = vsub.f32 %v1905, %v1914
  %v1916 = vsub.f32 0.0, %v1915
  %vm1917 = vcmp.eq.s32.totalorder %v1137, 0
  %1919 = vset.pattern.permute.xlu0 0
  %1920 = vperm.xlu0 %1919, %v1132
  %v1921 = vpop.permute.xlu0 %1920
  %v1923 = vsel %vm1917, %v1921, 0.0
  %vm1924 = vcmp.eq.s32.totalorder %v1137, 1
  %1926 = vset.pattern.permute.xlu0 0
  %1927 = vperm.xlu0 %1926, %v1643
  %v1928 = vpop.permute.xlu0 %1927
  %v1930 = vsel %vm1924, %v1928, 0.0
  %v1931 = vadd.f32 %v1923, %v1930
  %vm1932 = vcmp.eq.s32.totalorder %v1137, 2
  %1934 = vset.pattern.permute.xlu0 0
  %1935 = vperm.xlu0 %1934, %v1916
  %v1936 = vpop.permute.xlu0 %1935
  %v1938 = vsel %vm1932, %v1936, 0.0
  %v1939 = vadd.f32 %v1931, %v1938
  %1940 = vst [vmem:[%s81] sm:$0x1] %v1939
  // Predicated region
  $region158: #{graph_c2r_forward.1} parent=0 // pred_check
    _
  $region159: #{graph_c2r_forward.1} parent=0 // pred_check_branch
    %1942 = sbr.rel (0) target = $region161
  $region160: #{graph_c2r_forward.1} parent=0 // pred_region
    _
  $region161: #{graph_c2r_forward.1} parent=0 // pred_fallthru
    _
  // Predicated region
  $region162: #{graph_c2r_forward.1} parent=0 // pred_check
    _
  $region163: #{graph_c2r_forward.1} parent=0 // pred_check_branch
    %1944 = sbr.rel (0) target = $region165
  $region164: #{graph_c2r_forward.1} parent=0 // pred_region
    _
  $region165: #{graph_c2r_forward.1} parent=0 // pred_fallthru
    _
  // Predicated region
  $region166: #{graph_c2r_forward.1} parent=0 // pred_check
    _
  $region167: #{graph_c2r_forward.1} parent=0 // pred_check_branch
    %1946 = sbr.rel (0) target = $region169
  $region168: #{graph_c2r_forward.1} parent=0 // pred_region
    _
  $region169: #{graph_c2r_forward.1} parent=0 // pred_fallthru
    _
  // Predicated region
  $region170: #{graph_c2r_forward.1} parent=0 // pred_check
    _
  $region171: #{graph_c2r_forward.1} parent=0 // pred_check_branch
    %1948 = sbr.rel (0) target = $region173
  $region172: #{graph_c2r_forward.1} parent=0 // pred_region
    _
  $region173: #{graph_c2r_forward.1} parent=0 // pred_fallthru
    _

</llo_original>
